<compile_context>
chip_gen: v6e
topology: v6e:2x2x1
jax: 0.10.0
libtpu: 0.0.40
codegen_flags: <defaults>
</compile_context>

<pallas_src>
import numpy as np
import jax
import jax.numpy as jnp
from jax import lax
from jax.experimental import pallas as pl
from jax.experimental.pallas import tpu as pltpu


# ------------------------------ configuration -------------------------------
BATCH = 2
NUM_CLSS = 10
ENC_THR = 0.5            # ImageToSpike threshold
V_THR = 0.25             # membrane threshold for spiking layers
W_QUANT = 1.0 / 64.0     # weights snapped to a 2^-6 grid (exact in bf16/f32)

SCNN_ARCH = {
    "inp_lyr": {"inp_chnls": 4, "inp_dmx": 16, "inp_dmy": 16},
    "conv_lyr_1": {"otp_chnls": 8, "kernel": 3},
    "conv_lyr_2": {"otp_chnls": 8, "kernel": 3},
    "dense_lyr_1": 64,
}

C0, H0, W0 = 4, 16, 16
O1, K1 = 8, 3
H1, W1 = H0 - K1 + 1, W0 - K1 + 1          # 14, 14
O2, K2 = 8, 3
H2, W2 = H1 - K2 + 1, W1 - K2 + 1          # 12, 12
N_DENSE = SCNN_ARCH["dense_lyr_1"]         # 64

# Stacked-row layout: row = b*H0 + y (padded to the full 32 rows at every
# layer), lane = x*channels + c (conv outputs padded to 128 lanes).
ROWS0 = BATCH * H0                          # 32
LANES0 = W0 * C0                            # 64  (conv1 input lanes)
LANES_PAD = 128                             # conv1/conv2 output lanes (padded)

# ---- packed-buffer layouts (host packing and kernel must agree) -------------
# wconv (bf16): rows 0:192 -> conv1 Toeplitz (K1*64), rows 192:576 -> conv2.
WCONV_ROWS = K1 * LANES0 + K2 * LANES_PAD   # 576

# wrdt (bf16, 128 rows): readout / dense weights, 128-aligned column offsets.
WR1_C0, WR1_C1 = 0, H1 * NUM_CLSS           # 0   .. 140
WR2_C0, WR2_C1 = 256, 256 + H2 * NUM_CLSS   # 256 .. 376
WD_C0, WD_C1 = 384, 384 + H2 * N_DENSE      # 384 .. 1152
WR3_C0, WR3_C1 = 1152, 1152 + NUM_CLSS      # 1152.. 1162
WRDT_COLS = WR3_C1

# masks (f32, 32 rows): per-row block masks + batch row-selector.
RSEL_C0, RSEL_C1 = 1152, 1152 + ROWS0       # 1152 .. 1184
MASKS_COLS = RSEL_C1

# aux (f32): block-sum ("Csum") matrices + biases.
CS1_R0, CS1_R1 = 0, H1 * NUM_CLSS           # 0   .. 140
CS2_R0, CS2_R1 = 144, 144 + H2 * NUM_CLSS   # 144 .. 264
B_ROW = 264                                 # 4 bias rows: br1, br2, bd, br3
AUX_ROWS, AUX_COLS = 272, 64

# single fused output: dv1 rows 0:32, dv2 rows 32:64, small results rows 64:72
OUT_SMALL_R0 = 4 * H0                       # 64
OUT_ROWS = OUT_SMALL_R0 + 8                 # 72


# ------------------------------ Pallas kernel --------------------------------
def _shift_up(x, k):
    """Rows shifted up by k (row r <- row r+k); trailing k rows are zero."""
    if k == 0:
        return x
    pad = jnp.zeros((k, x.shape[1]), x.dtype)
    return jnp.concatenate([x[k:, :], pad], axis=0)


def _tfr_scnn_kernel(x_ref, wconv_ref, wrdt_ref, masks_ref, aux_ref, out_ref):
    f32, bf16 = jnp.float32, jnp.bfloat16

    # clear the small-results tile so unwritten lanes come back as zeros
    out_ref[OUT_SMALL_R0:OUT_SMALL_R0 + 8, :] = jnp.zeros((8, 128), f32)

    rsel = masks_ref[0:BATCH, RSEL_C0:RSEL_C1]                    # (2, 32) f32

    # ---- ImageToSpike encoder ----
    spk0 = (x_ref[...] >= ENC_THR).astype(f32)                    # (32, 64)

    # ---- SpkConvLayer 1: one merged Toeplitz matmul (K = 3*64) ----
    lhs1 = jnp.concatenate(
        [spk0, _shift_up(spk0, 1), _shift_up(spk0, 2)], axis=1)   # (32, 192)
    dv1 = jnp.dot(lhs1.astype(bf16), wconv_ref[0:K1 * LANES0, :],
                  preferred_element_type=f32)                     # (32, 128)
    out_ref[0:ROWS0, :] = dv1                                     # lane-dense store
    spk1 = (dv1 >= V_THR).astype(f32)                             # pad lanes stay 0

    # ---- conv_lyr_1 readout: mask -> block-sum matmul -> batch row-sum ----
    p1 = jnp.dot(spk1.astype(bf16), wrdt_ref[0:128, WR1_C0:WR1_C1],
                 preferred_element_type=f32)                      # (32, 140)
    pm1 = p1 * masks_ref[:, WR1_C0:WR1_C1]
    lgr1 = jnp.dot(pm1, aux_ref[CS1_R0:CS1_R1, 0:NUM_CLSS],
                   preferred_element_type=f32)                    # (32, 10)
    lg1 = (jnp.dot(rsel, lgr1, preferred_element_type=f32)
           + aux_ref[B_ROW:B_ROW + 1, 0:NUM_CLSS])                # (2, 10)
    out_ref[OUT_SMALL_R0 + 0:OUT_SMALL_R0 + 2, 0:NUM_CLSS] = lg1

    # ---- SpkConvLayer 2: one merged Toeplitz matmul (K = 3*128) ----
    lhs2 = jnp.concatenate(
        [spk1, _shift_up(spk1, 1), _shift_up(spk1, 2)], axis=1)   # (32, 384)
    dv2 = jnp.dot(lhs2.astype(bf16),
                  wconv_ref[K1 * LANES0:K1 * LANES0 + K2 * LANES_PAD, :],
                  preferred_element_type=f32)                     # (32, 128)
    out_ref[ROWS0:2 * ROWS0, :] = dv2
    spk2_bf = (dv2 >= V_THR).astype(bf16)                         # pad lanes stay 0

    # ---- conv_lyr_2 readout + SpkDenseLayer: one matmul over [wr2 | wd] ----
    p2d = jnp.dot(spk2_bf, wrdt_ref[0:128, WR2_C0:WD_C1],
                  preferred_element_type=f32)                     # (32, 896)
    pm2d = p2d * masks_ref[:, WR2_C0:WD_C1]

    lgr2 = jnp.dot(pm2d[:, 0:H2 * NUM_CLSS],
                   aux_ref[CS2_R0:CS2_R1, 0:NUM_CLSS],
                   preferred_element_type=f32)                    # (32, 10)
    lg2 = (jnp.dot(rsel, lgr2, preferred_element_type=f32)
           + aux_ref[B_ROW + 1:B_ROW + 2, 0:NUM_CLSS])            # (2, 10)
    out_ref[OUT_SMALL_R0 + 2:OUT_SMALL_R0 + 4, 0:NUM_CLSS] = lg2

    # dense collapse: 128-aligned tile adds + one 64-lane fold
    s = pm2d[:, 128:256]
    for off in range(256, 896, 128):
        s = s + pm2d[:, off:off + 128]
    dvd_rows = s[:, 0:N_DENSE] + s[:, N_DENSE:2 * N_DENSE]        # (32, 64)
    dvd = (jnp.dot(rsel, dvd_rows, preferred_element_type=f32)
           + aux_ref[B_ROW + 2:B_ROW + 3, 0:N_DENSE])             # (2, 64)
    out_ref[OUT_SMALL_R0 + 6:OUT_SMALL_R0 + 8, 0:N_DENSE] = dvd
    spkd_bf = (dvd >= V_THR).astype(bf16)

    # ---- dense_lyr_1 readout ----
    lg3 = (jnp.dot(spkd_bf, wrdt_ref[0:N_DENSE, WR3_C0:WR3_C1],
                   preferred_element_type=f32)
           + aux_ref[B_ROW + 3:B_ROW + 4, 0:NUM_CLSS])            # (2, 10)
    out_ref[OUT_SMALL_R0 + 4:OUT_SMALL_R0 + 6, 0:NUM_CLSS] = lg3


# ------------------------------ parameter init -------------------------------
def _qnt(w):
    # Snap to a 2^-6 grid and clamp to |w| <= 4 so every weight (and every
    # partial sum in this forward) is exactly representable in bf16/f32.
    return jnp.clip(jnp.round(w / W_QUANT), -256.0, 256.0) * W_QUANT


def init_module_params(key):
    """Parameters in the PyTorch module's native layouts."""
    n1 = O1 * H1 * W1          # 1568
    n2 = O2 * H2 * W2          # 1152
    ks = jax.random.split(key, 10)
    return {
        # SpkConvLayer weights: Conv2d (O, C, KH, KW), bias-free
        "conv_w_1": _qnt(jax.random.normal(ks[0], (O1, C0, K1, K1)) * (2.0 / (C0 * K1 * K1)) ** 0.5),
        "conv_w_2": _qnt(jax.random.normal(ks[1], (O2, O1, K2, K2)) * (2.0 / (O1 * K2 * K2)) ** 0.5),
        # DenseReadoutLayer (non-trainable): Linear (out, in) + bias
        "rdt_w_1": _qnt(jax.random.normal(ks[2], (NUM_CLSS, n1)) * (1.0 / n1) ** 0.5),
        "rdt_b_1": _qnt(jax.random.normal(ks[3], (NUM_CLSS,)) * 0.1),
        "rdt_w_2": _qnt(jax.random.normal(ks[4], (NUM_CLSS, n2)) * (1.0 / n2) ** 0.5),
        "rdt_b_2": _qnt(jax.random.normal(ks[5], (NUM_CLSS,)) * 0.1),
        # SpkDenseLayer: Linear (out, in) + bias
        "dense_w_1": _qnt(jax.random.normal(ks[6], (N_DENSE, n2)) * (2.0 / n2) ** 0.5),
        "dense_b_1": _qnt(jax.random.normal(ks[7], (N_DENSE,)) * 0.1),
        # dense readout
        "rdt_w_d1": _qnt(jax.random.normal(ks[8], (NUM_CLSS, N_DENSE)) * (1.0 / N_DENSE) ** 0.5),
        "rdt_b_d1": _qnt(jax.random.normal(ks[9], (NUM_CLSS,)) * 0.1),
    }


def pack_params(mp):
    """One-time host-side packing into the 4 constant buffers the kernel uses."""

    def toeplitz_cat(wc, w_in, lane_stride, lanes_out):
        # (O,C,KH,KW) -> (KH*lane_stride, lanes_out); block ky rows = x*C+c,
        # cols = ox*O+o; unused rows/cols stay zero (lane padding).
        wc = np.asarray(wc, np.float32)
        o, c, kh, kw = wc.shape
        ow = w_in - kw + 1
        t = np.zeros((kh * lane_stride, lanes_out), np.float32)
        for ky in range(kh):
            for ox in range(ow):
                for kx in range(kw):
                    x = ox + kx
                    r0 = ky * lane_stride + x * c
                    t[r0:r0 + c, ox * o:(ox + 1) * o] = wc[:, :, ky, kx].T
        return t

    def readout_cols(w, oh, ow, ch, n_rows):
        # Linear over NCHW-flattened spikes -> (n_rows, oh*n_out) with
        # row = ox*ch + c (the stacked lane layout), col = oy*n_out + j.
        w = np.asarray(w, np.float32)
        n_out = w.shape[0]
        a = w.reshape(n_out, ch, oh, ow).transpose(2, 3, 1, 0)     # (oh,ow,ch,n_out)
        wcat = a.reshape(oh, ow * ch, n_out).transpose(1, 0, 2).reshape(ow * ch, oh * n_out)
        out = np.zeros((n_rows, oh * n_out), np.float32)
        out[0:ow * ch, :] = wcat
        return out

    def row_mask(oh, n_out):
        m = np.zeros((ROWS0, oh * n_out), np.float32)
        for r in range(ROWS0):
            oy = r % H0
            if oy < oh:
                m[r, oy * n_out:(oy + 1) * n_out] = 1.0
        return m

    def block_sum(oh, n_out):
        cs = np.zeros((oh * n_out, n_out), np.float32)
        for oy in range(oh):
            cs[oy * n_out:(oy + 1) * n_out, :] = np.eye(n_out, dtype=np.float32)
        return cs

    # conv Toeplitz blob (bf16)
    wconv = np.zeros((WCONV_ROWS, LANES_PAD), np.float32)
    wconv[0:K1 * LANES0, :] = toeplitz_cat(mp["conv_w_1"], W0, LANES0, LANES_PAD)
    wconv[K1 * LANES0:, :] = toeplitz_cat(mp["conv_w_2"], W1, LANES_PAD, LANES_PAD)

    # readout / dense weight blob (bf16)
    wrdt = np.zeros((128, WRDT_COLS), np.float32)
    wrdt[:, WR1_C0:WR1_C1] = readout_cols(mp["rdt_w_1"], H1, W1, O1, 128)
    wrdt[:, WR2_C0:WR2_C1] = readout_cols(mp["rdt_w_2"], H2, W2, O2, 128)
    wrdt[:, WD_C0:WD_C1] = readout_cols(mp["dense_w_1"], H2, W2, O2, 128)
    wrdt[0:N_DENSE, WR3_C0:WR3_C1] = np.asarray(mp["rdt_w_d1"], np.float32).T

    # masks / row-selector blob (f32)
    masks = np.zeros((ROWS0, MASKS_COLS), np.float32)
    masks[:, WR1_C0:WR1_C1] = row_mask(H1, NUM_CLSS)
    masks[:, WR2_C0:WR2_C1] = row_mask(H2, NUM_CLSS)
    masks[:, WD_C0:WD_C1] = row_mask(H2, N_DENSE)
    for b in range(BATCH):
        masks[b, RSEL_C0 + b * H0:RSEL_C0 + (b + 1) * H0] = 1.0

    # block-sum + bias blob (f32)
    aux = np.zeros((AUX_ROWS, AUX_COLS), np.float32)
    aux[CS1_R0:CS1_R1, 0:NUM_CLSS] = block_sum(H1, NUM_CLSS)
    aux[CS2_R0:CS2_R1, 0:NUM_CLSS] = block_sum(H2, NUM_CLSS)
    aux[B_ROW + 0, 0:NUM_CLSS] = np.asarray(mp["rdt_b_1"], np.float32)
    aux[B_ROW + 1, 0:NUM_CLSS] = np.asarray(mp["rdt_b_2"], np.float32)
    aux[B_ROW + 2, 0:N_DENSE] = np.asarray(mp["dense_b_1"], np.float32)
    aux[B_ROW + 3, 0:NUM_CLSS] = np.asarray(mp["rdt_b_d1"], np.float32)

    return {
        "wconv": jnp.asarray(wconv, jnp.bfloat16),
        "wrdt": jnp.asarray(wrdt, jnp.bfloat16),
        "masks": jnp.asarray(masks, jnp.float32),
        "aux": jnp.asarray(aux, jnp.float32),
    }


# ------------------------------ fused forward --------------------------------
_VMEM = pl.BlockSpec(memory_space=pltpu.MemorySpace.VMEM)


@jax.jit
def tfr_rtrl_scnn_forward(x, packed):
    # NCHW -> stacked (b*H0 + y, x*C0 + c) rows; the only per-call layout op.
    x_rows = x.astype(jnp.float32).transpose(0, 2, 3, 1).reshape(ROWS0, W0 * C0)

    out = pl.pallas_call(
        _tfr_scnn_kernel,
        out_shape=jax.ShapeDtypeStruct((OUT_ROWS, 128), jnp.float32),
        in_specs=[_VMEM] * 5,
        out_specs=_VMEM,
    )(x_rows, packed["wconv"], packed["wrdt"], packed["masks"], packed["aux"])

    # split the single fused output slab (module contract: NCHW delta_v)
    dv1 = out[0:2 * H0, 0:W1 * O1].reshape(BATCH, H0, W1, O1)[:, 0:H1]
    dv1 = jnp.transpose(dv1, (0, 3, 1, 2))                          # (B, O1, H1, W1)
    dv2 = out[2 * H0:4 * H0, 0:W2 * O2].reshape(BATCH, H0, W2, O2)[:, 0:H2]
    dv2 = jnp.transpose(dv2, (0, 3, 1, 2))                          # (B, O2, H2, W2)
    base = OUT_SMALL_R0
    lg1 = out[base + 0:base + 2, 0:NUM_CLSS]
    lg2 = out[base + 2:base + 4, 0:NUM_CLSS]
    lg3 = out[base + 4:base + 6, 0:NUM_CLSS]
    dvd = out[base + 6:base + 8, 0:N_DENSE]

    all_hdl_1_ts_delta_v = {"conv_lyr_1": dv1, "conv_lyr_2": dv2, "dense_lyr_1": dvd}
    all_rol_1_ts_logits = {"conv_lyr_1": lg1, "conv_lyr_2": lg2, "dense_lyr_1": lg3}
    return all_hdl_1_ts_delta_v, all_rol_1_ts_logits


# ------------------------------ plain-JAX reference --------------------------
def reference_forward(x, mp):
    f32 = jnp.float32
    spk = (x >= ENC_THR).astype(f32)
    out_dv, out_lg = {}, {}
    conv_ws = [mp["conv_w_1"], mp["conv_w_2"]]
    rdts = [(mp["rdt_w_1"], mp["rdt_b_1"]), (mp["rdt_w_2"], mp["rdt_b_2"])]
    for i, (cw, (rw, rb)) in enumerate(zip(conv_ws, rdts)):
        dv = lax.conv_general_dilated(spk, cw.astype(f32), (1, 1), "VALID",
                                      dimension_numbers=("NCHW", "OIHW", "NCHW"))
        spk = (dv >= V_THR).astype(f32)
        flat = spk.reshape(spk.shape[0], -1)
        out_dv["conv_lyr_%d" % (i + 1)] = dv
        out_lg["conv_lyr_%d" % (i + 1)] = flat @ rw.T + rb
    spk = spk.reshape(spk.shape[0], -1)
    dv = spk @ mp["dense_w_1"].T + mp["dense_b_1"]
    spk = (dv >= V_THR).astype(f32)
    out_dv["dense_lyr_1"] = dv
    out_lg["dense_lyr_1"] = spk @ mp["rdt_w_d1"].T + mp["rdt_b_d1"]
    return out_dv, out_lg


# ------------------------------ main ------------------------------------------
if __name__ == "__main__":
    key = jax.random.PRNGKey(0)
    key, xkey, pkey = jax.random.split(key, 3)

    x = jax.random.uniform(xkey, (BATCH, C0, H0, W0), dtype=jnp.float32)  # all >= 0

    module_params = init_module_params(pkey)
    packed = pack_params(module_params)          # one-time host-side packing

    all_dv, all_lg = tfr_rtrl_scnn_forward(x, packed)
    jax.block_until_ready((all_dv, all_lg))

    # structure / shape checks (module return contract)
    assert set(all_lg.keys()) == {"conv_lyr_1", "conv_lyr_2", "dense_lyr_1"}
    assert all_dv["conv_lyr_1"].shape == (BATCH, O1, H1, W1)
    assert all_dv["conv_lyr_2"].shape == (BATCH, O2, H2, W2)
    assert all_dv["dense_lyr_1"].shape == (BATCH, N_DENSE)
    for v in all_lg.values():
        assert v.shape == (BATCH, NUM_CLSS)

    # numerical self-check against the plain-JAX reference
    ref_dv, ref_lg = reference_forward(x, module_params)
    for k in ref_dv:
        np.testing.assert_allclose(np.asarray(all_dv[k]), np.asarray(ref_dv[k]),
                                   atol=1e-3, rtol=1e-3)
    for k in ref_lg:
        np.testing.assert_allclose(np.asarray(all_lg[k]), np.asarray(ref_lg[k]),
                                   atol=1e-3, rtol=1e-3)

    print("KERNEL_OK")
</pallas_src>

<mosaic_0001>
module attributes {stable_mosaic.version = 11 : i64} {
  func.func @_tfr_scnn_kernel(%arg0: memref<32x64xf32, #tpu.memory_space<vmem>>, %arg1: memref<576x128xbf16, #tpu.memory_space<vmem>>, %arg2: memref<128x1162xbf16, #tpu.memory_space<vmem>>, %arg3: memref<32x1184xf32, #tpu.memory_space<vmem>>, %arg4: memref<272x64xf32, #tpu.memory_space<vmem>>, %arg5: memref<72x128xf32, #tpu.memory_space<vmem>>) attributes {dimension_semantics = [], scalar_prefetch = 0 : i64, scratch_operands = 0 : i64, tpu.core_type = #tpu.core_type<tc>} {
    %cst = arith.constant 0.000000e+00 : f32
    %0 = vector.broadcast %cst : f32 to vector<8x128xf32>
    %c64 = arith.constant 64 : index
    %c0 = arith.constant 0 : index
    %1 = vector.load %arg5[%c64, %c0] : memref<72x128xf32, #tpu.memory_space<vmem>>, vector<8x128xf32>
    tpu.vector_store %arg5[%c64, %c0], %0 {strides = array<i32>} : memref<72x128xf32, #tpu.memory_space<vmem>>, vector<8x128xf32>,
    %c0_0 = arith.constant 0 : index
    %c1152 = arith.constant 1152 : index
    %2 = vector.load %arg3[%c0_0, %c1152] : memref<32x1184xf32, #tpu.memory_space<vmem>>, vector<2x32xf32>
    %c0_1 = arith.constant 0 : index
    %c0_2 = arith.constant 0 : index
    %3 = vector.load %arg0[%c0_1, %c0_2] : memref<32x64xf32, #tpu.memory_space<vmem>>, vector<32x64xf32>
    %cst_3 = arith.constant 5.000000e-01 : f32
    %4 = vector.broadcast %cst_3 : f32 to vector<32x64xf32>
    %5 = arith.cmpf oge, %3, %4 : vector<32x64xf32>
    %6 = arith.extui %5 : vector<32x64xi1> to vector<32x64xi32>
    %7 = arith.sitofp %6 : vector<32x64xi32> to vector<32x64xf32>
    %cst_4 = arith.constant 0.000000e+00 : f32
    %8 = vector.broadcast %cst_4 : f32 to vector<1x64xf32>
    %9 = vector.extract_strided_slice %7 {offsets = [1, 0], sizes = [31, 64], strides = [1, 1]} : vector<32x64xf32> to vector<31x64xf32>
    %10 = tpu.concatenate %9, %8 in 0 : vector<31x64xf32>, vector<1x64xf32> -> vector<32x64xf32>
    %cst_5 = arith.constant 0.000000e+00 : f32
    %11 = vector.broadcast %cst_5 : f32 to vector<2x64xf32>
    %12 = vector.extract_strided_slice %7 {offsets = [2, 0], sizes = [30, 64], strides = [1, 1]} : vector<32x64xf32> to vector<30x64xf32>
    %13 = tpu.concatenate %12, %11 in 0 : vector<30x64xf32>, vector<2x64xf32> -> vector<32x64xf32>
    %14 = tpu.concatenate %7, %10, %13 in 1 : vector<32x64xf32>, vector<32x64xf32>, vector<32x64xf32> -> vector<32x192xf32>
    %15 = arith.truncf %14 : vector<32x192xf32> to vector<32x192xbf16>
    %c0_6 = arith.constant 0 : index
    %c0_7 = arith.constant 0 : index
    %16 = vector.load %arg1[%c0_6, %c0_7] : memref<576x128xbf16, #tpu.memory_space<vmem>>, vector<192x128xbf16>
    %cst_8 = arith.constant dense<0.000000e+00> : vector<32x128xf32>
    %17 = tpu.matmul %15, %16, %cst_8 {dimension_numbers = #tpu.dot_dimension_numbers<[1], [0], [0], [1], [0, 0, 1, 1], [], []>} : vector<32x192xbf16>, vector<192x128xbf16>, vector<32x128xf32> -> vector<32x128xf32>
    %c0_9 = arith.constant 0 : index
    %c0_10 = arith.constant 0 : index
    %18 = vector.load %arg5[%c0_9, %c0_10] : memref<72x128xf32, #tpu.memory_space<vmem>>, vector<32x128xf32>
    tpu.vector_store %arg5[%c0_9, %c0_10], %17 {strides = array<i32>} : memref<72x128xf32, #tpu.memory_space<vmem>>, vector<32x128xf32>,
    %cst_11 = arith.constant 2.500000e-01 : f32
    %19 = vector.broadcast %cst_11 : f32 to vector<32x128xf32>
    %20 = arith.cmpf oge, %17, %19 : vector<32x128xf32>
    %21 = arith.extui %20 : vector<32x128xi1> to vector<32x128xi32>
    %22 = arith.sitofp %21 : vector<32x128xi32> to vector<32x128xf32>
    %23 = arith.truncf %22 : vector<32x128xf32> to vector<32x128xbf16>
    %c0_12 = arith.constant 0 : index
    %c0_13 = arith.constant 0 : index
    %24 = vector.load %arg2[%c0_12, %c0_13] : memref<128x1162xbf16, #tpu.memory_space<vmem>>, vector<128x140xbf16>
    %cst_14 = arith.constant dense<0.000000e+00> : vector<32x140xf32>
    %25 = tpu.matmul %23, %24, %cst_14 {dimension_numbers = #tpu.dot_dimension_numbers<[1], [0], [0], [1], [0, 0, 1, 1], [], []>} : vector<32x128xbf16>, vector<128x140xbf16>, vector<32x140xf32> -> vector<32x140xf32>
    %c0_15 = arith.constant 0 : index
    %c0_16 = arith.constant 0 : index
    %26 = vector.load %arg3[%c0_15, %c0_16] : memref<32x1184xf32, #tpu.memory_space<vmem>>, vector<32x140xf32>
    %27 = arith.mulf %25, %26 : vector<32x140xf32>
    %c0_17 = arith.constant 0 : index
    %c0_18 = arith.constant 0 : index
    %28 = vector.load %arg4[%c0_17, %c0_18] : memref<272x64xf32, #tpu.memory_space<vmem>>, vector<140x10xf32>
    %cst_19 = arith.constant dense<0.000000e+00> : vector<32x10xf32>
    %29 = tpu.matmul %27, %28, %cst_19 {dimension_numbers = #tpu.dot_dimension_numbers<[1], [0], [0], [1], [0, 0, 1, 1], [], []>} : vector<32x140xf32>, vector<140x10xf32>, vector<32x10xf32> -> vector<32x10xf32>
    %cst_20 = arith.constant dense<0.000000e+00> : vector<2x10xf32>
    %30 = tpu.matmul %2, %29, %cst_20 {dimension_numbers = #tpu.dot_dimension_numbers<[1], [0], [0], [1], [0, 0, 1, 1], [], []>} : vector<2x32xf32>, vector<32x10xf32>, vector<2x10xf32> -> vector<2x10xf32>
    %c264 = arith.constant 264 : index
    %c0_21 = arith.constant 0 : index
    %31 = vector.load %arg4[%c264, %c0_21] : memref<272x64xf32, #tpu.memory_space<vmem>>, vector<1x10xf32>
    %32 = vector.broadcast %31 : vector<1x10xf32> to vector<2x10xf32>
    %33 = arith.addf %30, %32 : vector<2x10xf32>
    %c64_22 = arith.constant 64 : index
    %c0_23 = arith.constant 0 : index
    %34 = vector.load %arg5[%c64_22, %c0_23] : memref<72x128xf32, #tpu.memory_space<vmem>>, vector<2x10xf32>
    tpu.vector_store %arg5[%c64_22, %c0_23], %33 {strides = array<i32>} : memref<72x128xf32, #tpu.memory_space<vmem>>, vector<2x10xf32>,
    %cst_24 = arith.constant 0.000000e+00 : f32
    %35 = vector.broadcast %cst_24 : f32 to vector<1x128xf32>
    %36 = vector.extract_strided_slice %22 {offsets = [1, 0], sizes = [31, 128], strides = [1, 1]} : vector<32x128xf32> to vector<31x128xf32>
    %37 = tpu.concatenate %36, %35 in 0 : vector<31x128xf32>, vector<1x128xf32> -> vector<32x128xf32>
    %cst_25 = arith.constant 0.000000e+00 : f32
    %38 = vector.broadcast %cst_25 : f32 to vector<2x128xf32>
    %39 = vector.extract_strided_slice %22 {offsets = [2, 0], sizes = [30, 128], strides = [1, 1]} : vector<32x128xf32> to vector<30x128xf32>
    %40 = tpu.concatenate %39, %38 in 0 : vector<30x128xf32>, vector<2x128xf32> -> vector<32x128xf32>
    %41 = tpu.concatenate %22, %37, %40 in 1 : vector<32x128xf32>, vector<32x128xf32>, vector<32x128xf32> -> vector<32x384xf32>
    %42 = arith.truncf %41 : vector<32x384xf32> to vector<32x384xbf16>
    %c192 = arith.constant 192 : index
    %c0_26 = arith.constant 0 : index
    %43 = vector.load %arg1[%c192, %c0_26] : memref<576x128xbf16, #tpu.memory_space<vmem>>, vector<384x128xbf16>
    %cst_27 = arith.constant dense<0.000000e+00> : vector<32x128xf32>
    %44 = tpu.matmul %42, %43, %cst_27 {dimension_numbers = #tpu.dot_dimension_numbers<[1], [0], [0], [1], [0, 0, 1, 1], [], []>} : vector<32x384xbf16>, vector<384x128xbf16>, vector<32x128xf32> -> vector<32x128xf32>
    %c32 = arith.constant 32 : index
    %c0_28 = arith.constant 0 : index
    %45 = vector.load %arg5[%c32, %c0_28] : memref<72x128xf32, #tpu.memory_space<vmem>>, vector<32x128xf32>
    tpu.vector_store %arg5[%c32, %c0_28], %44 {strides = array<i32>} : memref<72x128xf32, #tpu.memory_space<vmem>>, vector<32x128xf32>,
    %cst_29 = arith.constant 2.500000e-01 : f32
    %46 = vector.broadcast %cst_29 : f32 to vector<32x128xf32>
    %47 = arith.cmpf oge, %44, %46 : vector<32x128xf32>
    %48 = arith.extui %47 : vector<32x128xi1> to vector<32x128xi32>
    %49 = arith.sitofp %48 : vector<32x128xi32> to vector<32x128xf32>
    %50 = arith.truncf %49 : vector<32x128xf32> to vector<32x128xbf16>
    %c0_30 = arith.constant 0 : index
    %c256 = arith.constant 256 : index
    %51 = vector.load %arg2[%c0_30, %c256] : memref<128x1162xbf16, #tpu.memory_space<vmem>>, vector<128x896xbf16>
    %cst_31 = arith.constant dense<0.000000e+00> : vector<32x896xf32>
    %52 = tpu.matmul %50, %51, %cst_31 {dimension_numbers = #tpu.dot_dimension_numbers<[1], [0], [0], [1], [0, 0, 1, 1], [], []>} : vector<32x128xbf16>, vector<128x896xbf16>, vector<32x896xf32> -> vector<32x896xf32>
    %c0_32 = arith.constant 0 : index
    %c256_33 = arith.constant 256 : index
    %53 = vector.load %arg3[%c0_32, %c256_33] : memref<32x1184xf32, #tpu.memory_space<vmem>>, vector<32x896xf32>
    %54 = arith.mulf %52, %53 : vector<32x896xf32>
    %55 = vector.extract_strided_slice %54 {offsets = [0, 0], sizes = [32, 120], strides = [1, 1]} : vector<32x896xf32> to vector<32x120xf32>
    %c144 = arith.constant 144 : index
    %c0_34 = arith.constant 0 : index
    %56 = vector.load %arg4[%c144, %c0_34] : memref<272x64xf32, #tpu.memory_space<vmem>>, vector<120x10xf32>
    %cst_35 = arith.constant dense<0.000000e+00> : vector<32x10xf32>
    %57 = tpu.matmul %55, %56, %cst_35 {dimension_numbers = #tpu.dot_dimension_numbers<[1], [0], [0], [1], [0, 0, 1, 1], [], []>} : vector<32x120xf32>, vector<120x10xf32>, vector<32x10xf32> -> vector<32x10xf32>
    %cst_36 = arith.constant dense<0.000000e+00> : vector<2x10xf32>
    %58 = tpu.matmul %2, %57, %cst_36 {dimension_numbers = #tpu.dot_dimension_numbers<[1], [0], [0], [1], [0, 0, 1, 1], [], []>} : vector<2x32xf32>, vector<32x10xf32>, vector<2x10xf32> -> vector<2x10xf32>
    %c265 = arith.constant 265 : index
    %c0_37 = arith.constant 0 : index
    %59 = vector.load %arg4[%c265, %c0_37] : memref<272x64xf32, #tpu.memory_space<vmem>>, vector<1x10xf32>
    %60 = vector.broadcast %59 : vector<1x10xf32> to vector<2x10xf32>
    %61 = arith.addf %58, %60 : vector<2x10xf32>
    %c66 = arith.constant 66 : index
    %c0_38 = arith.constant 0 : index
    %62 = vector.load %arg5[%c66, %c0_38] : memref<72x128xf32, #tpu.memory_space<vmem>>, vector<2x10xf32>
    tpu.vector_store %arg5[%c66, %c0_38], %61 {strides = array<i32>} : memref<72x128xf32, #tpu.memory_space<vmem>>, vector<2x10xf32>,
    %63 = vector.extract_strided_slice %54 {offsets = [0, 128], sizes = [32, 128], strides = [1, 1]} : vector<32x896xf32> to vector<32x128xf32>
    %64 = vector.extract_strided_slice %54 {offsets = [0, 256], sizes = [32, 128], strides = [1, 1]} : vector<32x896xf32> to vector<32x128xf32>
    %65 = arith.addf %63, %64 : vector<32x128xf32>
    %66 = vector.extract_strided_slice %54 {offsets = [0, 384], sizes = [32, 128], strides = [1, 1]} : vector<32x896xf32> to vector<32x128xf32>
    %67 = arith.addf %65, %66 : vector<32x128xf32>
    %68 = vector.extract_strided_slice %54 {offsets = [0, 512], sizes = [32, 128], strides = [1, 1]} : vector<32x896xf32> to vector<32x128xf32>
    %69 = arith.addf %67, %68 : vector<32x128xf32>
    %70 = vector.extract_strided_slice %54 {offsets = [0, 640], sizes = [32, 128], strides = [1, 1]} : vector<32x896xf32> to vector<32x128xf32>
    %71 = arith.addf %69, %70 : vector<32x128xf32>
    %72 = vector.extract_strided_slice %54 {offsets = [0, 768], sizes = [32, 128], strides = [1, 1]} : vector<32x896xf32> to vector<32x128xf32>
    %73 = arith.addf %71, %72 : vector<32x128xf32>
    %74 = vector.extract_strided_slice %73 {offsets = [0, 0], sizes = [32, 64], strides = [1, 1]} : vector<32x128xf32> to vector<32x64xf32>
    %75 = vector.extract_strided_slice %73 {offsets = [0, 64], sizes = [32, 64], strides = [1, 1]} : vector<32x128xf32> to vector<32x64xf32>
    %76 = arith.addf %74, %75 : vector<32x64xf32>
    %cst_39 = arith.constant dense<0.000000e+00> : vector<2x64xf32>
    %77 = tpu.matmul %2, %76, %cst_39 {dimension_numbers = #tpu.dot_dimension_numbers<[1], [0], [0], [1], [0, 0, 1, 1], [], []>} : vector<2x32xf32>, vector<32x64xf32>, vector<2x64xf32> -> vector<2x64xf32>
    %c266 = arith.constant 266 : index
    %c0_40 = arith.constant 0 : index
    %78 = vector.load %arg4[%c266, %c0_40] : memref<272x64xf32, #tpu.memory_space<vmem>>, vector<1x64xf32>
    %79 = vector.broadcast %78 : vector<1x64xf32> to vector<2x64xf32>
    %80 = arith.addf %77, %79 : vector<2x64xf32>
    %c70 = arith.constant 70 : index
    %c0_41 = arith.constant 0 : index
    %81 = vector.load %arg5[%c70, %c0_41] : memref<72x128xf32, #tpu.memory_space<vmem>>, vector<2x64xf32>
    tpu.vector_store %arg5[%c70, %c0_41], %80 {strides = array<i32>} : memref<72x128xf32, #tpu.memory_space<vmem>>, vector<2x64xf32>,
    %cst_42 = arith.constant 2.500000e-01 : f32
    %82 = vector.broadcast %cst_42 : f32 to vector<2x64xf32>
    %83 = arith.cmpf oge, %80, %82 : vector<2x64xf32>
    %84 = arith.extui %83 : vector<2x64xi1> to vector<2x64xi32>
    %85 = arith.sitofp %84 : vector<2x64xi32> to vector<2x64xf32>
    %86 = arith.truncf %85 : vector<2x64xf32> to vector<2x64xbf16>
    %c0_43 = arith.constant 0 : index
    %c1152_44 = arith.constant 1152 : index
    %87 = vector.load %arg2[%c0_43, %c1152_44] : memref<128x1162xbf16, #tpu.memory_space<vmem>>, vector<64x10xbf16>
    %cst_45 = arith.constant dense<0.000000e+00> : vector<2x10xf32>
    %88 = tpu.matmul %86, %87, %cst_45 {dimension_numbers = #tpu.dot_dimension_numbers<[1], [0], [0], [1], [0, 0, 1, 1], [], []>} : vector<2x64xbf16>, vector<64x10xbf16>, vector<2x10xf32> -> vector<2x10xf32>
    %c267 = arith.constant 267 : index
    %c0_46 = arith.constant 0 : index
    %89 = vector.load %arg4[%c267, %c0_46] : memref<272x64xf32, #tpu.memory_space<vmem>>, vector<1x10xf32>
    %90 = vector.broadcast %89 : vector<1x10xf32> to vector<2x10xf32>
    %91 = arith.addf %88, %90 : vector<2x10xf32>
    %c68 = arith.constant 68 : index
    %c0_47 = arith.constant 0 : index
    %92 = vector.load %arg5[%c68, %c0_47] : memref<72x128xf32, #tpu.memory_space<vmem>>, vector<2x10xf32>
    tpu.vector_store %arg5[%c68, %c0_47], %91 {strides = array<i32>} : memref<72x128xf32, #tpu.memory_space<vmem>>, vector<2x10xf32>,
    return
  }
}

</mosaic_0001>

<llo_original>
// kernel: tfr_rtrl_scnn_forward.1
$region0: #{tfr_rtrl_scnn_forward.1}
  #allocation0 [shape = 'u32[]', space=smem, size = 0x4, offset = 0x4, fixed_abs, tag = 'smem constant byte address 0x4 - core index']
  #allocation1 [shape = 'u32[144,128]{1,0:T(1,128)}', space=vmem, size = 0x12000, scoped, tag = 'internal scratch']
  %s0 = inlined_call_operand.vmem [shape: f32[32,64], index: 0, kind: input, shape index: {}]
  %s1 = inlined_call_operand.vmem [shape: bf16[576,128], index: 1, kind: input, shape index: {}]
  %s2 = inlined_call_operand.vmem [shape: bf16[128,1162], index: 2, kind: input, shape index: {}]
  %s3 = inlined_call_operand.vmem [shape: f32[32,1184], index: 3, kind: input, shape index: {}]
  %s4 = inlined_call_operand.vmem [shape: f32[272,64], index: 4, kind: input, shape index: {}]
  %s5 = inlined_call_operand.vmem [shape: f32[72,128], index: 5, kind: output, shape index: {}]
  %s6 = sld [smem:[#allocation0]]
  $region30: #{tfr_rtrl_scnn_forward.1} parent=0
    _
  %s8 = ssub.s32 1, %s6
  %s9 = scalar_select 0, %s8, %s6
  // Predicated region
  $region2: #{tfr_rtrl_scnn_forward.1} parent=0 // pred_check
    _
  $region3: #{tfr_rtrl_scnn_forward.1} parent=0 // pred_check_branch
    %11 = sbr.rel (0) target = $region5
  $region4: #{tfr_rtrl_scnn_forward.1} parent=0 // pred_region
    _
  $region5: #{tfr_rtrl_scnn_forward.1} parent=0 // pred_fallthru
    _
  // Predicated region
  $region6: #{tfr_rtrl_scnn_forward.1} parent=0 // pred_check
    _
  $region7: #{tfr_rtrl_scnn_forward.1} parent=0 // pred_check_branch
    %13 = sbr.rel (0) target = $region9
  $region8: #{tfr_rtrl_scnn_forward.1} parent=0 // pred_region
    _
  $region9: #{tfr_rtrl_scnn_forward.1} parent=0 // pred_fallthru
    _
  // Predicated region
  $region10: #{tfr_rtrl_scnn_forward.1} parent=0 // pred_check
    _
  $region11: #{tfr_rtrl_scnn_forward.1} parent=0 // pred_check_branch
    %15 = sbr.rel (0) target = $region13
  $region12: #{tfr_rtrl_scnn_forward.1} parent=0 // pred_region
    _
  $region13: #{tfr_rtrl_scnn_forward.1} parent=0 // pred_fallthru
    _
  // Predicated region
  $region14: #{tfr_rtrl_scnn_forward.1} parent=0 // pred_check
    _
  $region15: #{tfr_rtrl_scnn_forward.1} parent=0 // pred_check_branch
    %17 = sbr.rel (0) target = $region17
  $region16: #{tfr_rtrl_scnn_forward.1} parent=0 // pred_region
    _
  $region17: #{tfr_rtrl_scnn_forward.1} parent=0 // pred_fallthru
    _
  // Predicated region
  $region18: #{tfr_rtrl_scnn_forward.1} parent=0 // pred_check
    _
  $region19: #{tfr_rtrl_scnn_forward.1} parent=0 // pred_check_branch
    %19 = sbr.rel (0) target = $region21
  $region20: #{tfr_rtrl_scnn_forward.1} parent=0 // pred_region
    _
  $region21: #{tfr_rtrl_scnn_forward.1} parent=0 // pred_fallthru
    _
  %21 = vst [vmem:[%s5 + $0x40] sm:$0xff] 0.0
  %v22 = vld [vmem:[%s3 + $0x48] sm:$0x3]
  %v23 = vld [vmem:[%s0] sm:$0xff]
  %v24 = vld [vmem:[%s0 + $0x8] sm:$0xff]
  %v25 = vld [vmem:[%s0 + $0x10] sm:$0xff]
  %v26 = vld [vmem:[%s0 + $0x18] sm:$0xff]
  %vm27 = vcmp.ge.f32.partialorder %v23, 0.5
  %vm28 = vcmp.ge.f32.partialorder %v24, 0.5
  %vm29 = vcmp.ge.f32.partialorder %v25, 0.5
  %vm30 = vcmp.ge.f32.partialorder %v26, 0.5
  %v31 = vsel %vm27, 1, 0
  %v32 = vsel %vm28, 1, 0
  %v33 = vsel %vm29, 1, 0
  %v34 = vsel %vm30, 1, 0
  %v35 = vcvt.s32.f32 %v31
  %v36 = vcvt.s32.f32 %v32
  %v37 = vcvt.s32.f32 %v33
  %v38 = vcvt.s32.f32 %v34
  %vm43 = vcmask 1046528
  %v44 = vrot.slane %v35, 1
  %v45 = vrot.slane %v36, 1
  %v46 = vsel %vm43, %v44, %v45
  %v47 = vrot.slane %v37, 1
  %v48 = vsel %vm43, %v45, %v47
  %v49 = vrot.slane %v38, 1
  %v50 = vsel %vm43, %v47, %v49
  %v52 = vsel %vm43, %v49, 0.0
  %vm53 = vcmask 1045504
  %v54 = vrot.slane %v35, 2
  %v55 = vrot.slane %v36, 2
  %v56 = vsel %vm53, %v54, %v55
  %v57 = vrot.slane %v37, 2
  %v58 = vsel %vm53, %v55, %v57
  %v59 = vrot.slane %v38, 2
  %v60 = vsel %vm53, %v57, %v59
  %v65 = vsel %vm53, %v59, 0.0
  %67 = vrot.lane.b32.xlu0 %v46, 64
  %v68 = vpop.permute.xlu0 %67
  %69 = vrot.lane.b32.xlu0 %v48, 64
  %v70 = vpop.permute.xlu0 %69
  %71 = vrot.lane.b32.xlu0 %v50, 64
  %v72 = vpop.permute.xlu0 %71
  %73 = vrot.lane.b32.xlu0 %v52, 64
  %v74 = vpop.permute.xlu0 %73
  %vm79 = vcmask 523264
  %v80 = vsel %vm79, %v35, %v68
  %v81 = vsel %vm79, %v36, %v70
  %v82 = vsel %vm79, %v37, %v72
  %v83 = vsel %vm79, %v38, %v74
  %v84 = vpack.c.bf16 %v81, %v80
  %v85 = vpack.c.bf16 %v58, %v56
  %v86 = vpack.c.bf16 %v83, %v82
  %v87 = vpack.c.bf16 %v65, %v60
  %v88 = vld [vmem:[%s1] sm:$0xf]
  %v89 = vld [vmem:[%s1 + $0x4] sm:$0xf]
  %v90 = vld [vmem:[%s1 + $0x8] sm:$0xf]
  %v91 = vld [vmem:[%s1 + $0xc] sm:$0xf]
  %v92 = vld [vmem:[%s1 + $0x10] sm:$0xf]
  %v93 = vld [vmem:[%s1 + $0x14] sm:$0xf]
  %v94 = vld [vmem:[%s1 + $0x18] sm:$0xf]
  %v95 = vld [vmem:[%s1 + $0x1c] sm:$0xf]
  %v96 = vld [vmem:[%s1 + $0x20] sm:$0xf]
  %v97 = vld [vmem:[%s1 + $0x24] sm:$0xf]
  %v98 = vld [vmem:[%s1 + $0x28] sm:$0xf]
  %v99 = vld [vmem:[%s1 + $0x2c] sm:$0xf]
  %v100 = vld [vmem:[%s1 + $0x30] sm:$0xf]
  %v101 = vld [vmem:[%s1 + $0x34] sm:$0xf]
  %v102 = vld [vmem:[%s1 + $0x38] sm:$0xf]
  %v103 = vld [vmem:[%s1 + $0x3c] sm:$0xf]
  %v104 = vld [vmem:[%s1 + $0x40] sm:$0xf]
  %v105 = vld [vmem:[%s1 + $0x44] sm:$0xf]
  %v106 = vld [vmem:[%s1 + $0x48] sm:$0xf]
  %v107 = vld [vmem:[%s1 + $0x4c] sm:$0xf]
  %v108 = vld [vmem:[%s1 + $0x50] sm:$0xf]
  %v109 = vld [vmem:[%s1 + $0x54] sm:$0xf]
  %v110 = vld [vmem:[%s1 + $0x58] sm:$0xf]
  %v111 = vld [vmem:[%s1 + $0x5c] sm:$0xf]
  %v136 = vunpack.c.l.b16 %v88
  %v137 = vunpack.c.l.b16 %v89
  %v138 = vunpack.c.l.b16 %v90
  %v139 = vunpack.c.l.b16 %v91
  %v140 = vunpack.c.l.b16 %v92
  %v141 = vunpack.c.l.b16 %v93
  %v142 = vunpack.c.l.b16 %v94
  %v143 = vunpack.c.l.b16 %v95
  %v144 = vunpack.c.l.b16 %v96
  %v145 = vunpack.c.l.b16 %v97
  %v146 = vunpack.c.l.b16 %v98
  %v147 = vunpack.c.l.b16 %v99
  %v148 = vunpack.c.l.b16 %v100
  %v149 = vunpack.c.l.b16 %v101
  %v150 = vunpack.c.l.b16 %v102
  %v151 = vunpack.c.l.b16 %v103
  %v152 = vunpack.c.l.b16 %v104
  %v153 = vunpack.c.l.b16 %v105
  %v154 = vunpack.c.l.b16 %v106
  %v155 = vunpack.c.l.b16 %v107
  %v156 = vunpack.c.l.b16 %v108
  %v157 = vunpack.c.l.b16 %v109
  %v158 = vunpack.c.l.b16 %v110
  %v159 = vunpack.c.l.b16 %v111
  %v160 = vpack.c.b16 %v137, %v136
  %v161 = vpack.c.b16 %v139, %v138
  %v162 = vpack.c.b16 %v141, %v140
  %v163 = vpack.c.b16 %v143, %v142
  %v164 = vpack.c.b16 %v145, %v144
  %v165 = vpack.c.b16 %v147, %v146
  %v166 = vpack.c.b16 %v149, %v148
  %v167 = vpack.c.b16 %v151, %v150
  %v168 = vpack.c.b16 %v153, %v152
  %v169 = vpack.c.b16 %v155, %v154
  %v170 = vpack.c.b16 %v157, %v156
  %v171 = vpack.c.b16 %v159, %v158
  %v185 = vsel %vm79, %v85, 0
  %v188 = vsel %vm79, %v87, 0
  %190 = vmatprep.subr.bf16.mxu0 0
  %191 = vmatpush1.bf16.msra.mxu0 %v167
  %192 = vmatprep.subr.bf16.mxu0 0
  %193 = vmatpush1.bf16.msra.mxu0 %v166
  %194 = vmatprep.subr.bf16.mxu0 0
  %195 = vmatpush1.bf16.msra.mxu0 %v165
  %196 = vmatprep.subr.bf16.mxu0 0
  %197 = vmatpush1.bf16.msra.mxu0 %v164
  %198 = vmatprep.subr.bf16.mxu0 0
  %199 = vmatpush1.bf16.msra.mxu0 %v163
  %200 = vmatprep.subr.bf16.mxu0 0
  %201 = vmatpush1.bf16.msra.mxu0 %v162
  %202 = vmatprep.subr.bf16.mxu0 0
  %203 = vmatpush1.bf16.msra.mxu0 %v161
  %204 = vmatprep.subr.bf16.mxu0 0
  %205 = vmatpush1.bf16.msra.mxu0 %v160
  %206 = vmatprep.subr.bf16.mxu0 0
  %207 = vmatpush2.bf16.msra.mxu0 0
  %208 = vmatprep.subr.bf16.mxu0 0
  %209 = vmatpush2.bf16.msra.mxu0 0
  %210 = vmatprep.subr.bf16.mxu0 0
  %211 = vmatpush2.bf16.msra.mxu0 0
  %212 = vmatprep.subr.bf16.mxu0 0
  %213 = vmatpush2.bf16.msra.mxu0 0
  %214 = vmatprep.subr.bf16.mxu0 0
  %215 = vmatpush2.bf16.msra.mxu0 %v171
  %216 = vmatprep.subr.bf16.mxu0 0
  %217 = vmatpush2.bf16.msra.mxu0 %v170
  %218 = vmatprep.subr.bf16.mxu0 0
  %219 = vmatpush2.bf16.msra.mxu0 %v169
  %220 = vmatprep.subr.bf16.mxu0 0
  %221 = vmatpush2.bf16.msra.mxu0 %v168
  %222 = vmatprep.mubr.bf16.mxu0 %v185
  %223 = vmatmul.mubr.bf16.gmra.mxu0 %v84
  %v224 = vpop.f32.mrf.mxu0
  %v225 = vadd.f32 0.0, %v224
  %v226 = vpop.f32.mrf.mxu0
  %v227 = vpop.f32.mrf.mxu0
  %v228 = vadd.f32 0.0, %v227
  %v229 = vpop.f32.mrf.mxu0
  %230 = vmatprep.mubr.bf16.mxu0 %v188
  %231 = vmatmul.mubr.bf16.gmra.mxu0 %v86
  %v232 = vpop.f32.mrf.mxu0
  %v233 = vadd.f32 0.0, %v232
  %v234 = vpop.f32.mrf.mxu0
  %v235 = vpop.f32.mrf.mxu0
  %v236 = vadd.f32 0.0, %v235
  %v237 = vpop.f32.mrf.mxu0
  %238 = vdwg.mxu0
  %239 = vst [vmem:[%s5] sm:$0xff] %v225
  %240 = vst [vmem:[%s5 + $0x8] sm:$0xff] %v228
  %241 = vst [vmem:[%s5 + $0x10] sm:$0xff] %v233
  %242 = vst [vmem:[%s5 + $0x18] sm:$0xff] %v236
  %vm243 = vcmp.ge.f32.partialorder %v225, 0.25
  %vm244 = vcmp.ge.f32.partialorder %v228, 0.25
  %vm245 = vcmp.ge.f32.partialorder %v233, 0.25
  %vm246 = vcmp.ge.f32.partialorder %v236, 0.25
  %v247 = vsel %vm243, 1, 0
  %v248 = vsel %vm244, 1, 0
  %v249 = vsel %vm245, 1, 0
  %v250 = vsel %vm246, 1, 0
  %v251 = vcvt.s32.f32 %v247
  %v252 = vcvt.s32.f32 %v248
  %v253 = vcvt.s32.f32 %v249
  %v254 = vcvt.s32.f32 %v250
  %v255 = vpack.c.bf16 %v252, %v251
  %v256 = vpack.c.bf16 %v254, %v253
  %v257 = vld [vmem:[%s2] sm:$0xff]
  %v258 = vld [vmem:[%s2 + $0x28] sm:$0xff]
  %v259 = vld [vmem:[%s2 + $0x50] sm:$0xff]
  %v260 = vld [vmem:[%s2 + $0x78] sm:$0xff]
  %v261 = vld [vmem:[%s2 + $0xa0] sm:$0xff]
  %v262 = vld [vmem:[%s2 + $0xc8] sm:$0xff]
  %v263 = vld [vmem:[%s2 + $0xf0] sm:$0xff]
  %v264 = vld [vmem:[%s2 + $0x118] sm:$0xff]
  %v265 = vld [vmem:[%s2 + $0x140] sm:$0xff]
  %v266 = vld [vmem:[%s2 + $0x168] sm:$0xff]
  %v267 = vld [vmem:[%s2 + $0x190] sm:$0xff]
  %v268 = vld [vmem:[%s2 + $0x1b8] sm:$0xff]
  %v269 = vld [vmem:[%s2 + $0x1e0] sm:$0xff]
  %v270 = vld [vmem:[%s2 + $0x208] sm:$0xff]
  %v271 = vld [vmem:[%s2 + $0x230] sm:$0xff]
  %v272 = vld [vmem:[%s2 + $0x258] sm:$0xff]
  %v289 = vunpack.c.l.b16 %v257
  %v290 = vunpack.c.h.b16 %v257
  %v291 = vunpack.c.l.b16 %v258
  %v292 = vunpack.c.h.b16 %v258
  %v293 = vunpack.c.l.b16 %v259
  %v294 = vunpack.c.h.b16 %v259
  %v295 = vunpack.c.l.b16 %v260
  %v296 = vunpack.c.h.b16 %v260
  %v297 = vunpack.c.l.b16 %v261
  %v298 = vunpack.c.h.b16 %v261
  %v299 = vunpack.c.l.b16 %v262
  %v300 = vunpack.c.h.b16 %v262
  %v301 = vunpack.c.l.b16 %v263
  %v302 = vunpack.c.h.b16 %v263
  %v303 = vunpack.c.l.b16 %v264
  %v304 = vunpack.c.h.b16 %v264
  %v305 = vunpack.c.l.b16 %v265
  %v306 = vunpack.c.h.b16 %v265
  %v307 = vunpack.c.l.b16 %v266
  %v308 = vunpack.c.h.b16 %v266
  %v309 = vunpack.c.l.b16 %v267
  %v310 = vunpack.c.h.b16 %v267
  %v311 = vunpack.c.l.b16 %v268
  %v312 = vunpack.c.h.b16 %v268
  %v313 = vunpack.c.l.b16 %v269
  %v314 = vunpack.c.h.b16 %v269
  %v315 = vunpack.c.l.b16 %v270
  %v316 = vunpack.c.h.b16 %v270
  %v317 = vunpack.c.l.b16 %v271
  %v318 = vunpack.c.h.b16 %v271
  %v319 = vunpack.c.l.b16 %v272
  %v320 = vunpack.c.h.b16 %v272
  %v321 = vpack.c.b16 %v291, %v289
  %v322 = vpack.c.b16 %v292, %v290
  %v323 = vpack.c.b16 %v295, %v293
  %v324 = vpack.c.b16 %v296, %v294
  %v325 = vpack.c.b16 %v299, %v297
  %v326 = vpack.c.b16 %v300, %v298
  %v327 = vpack.c.b16 %v303, %v301
  %v328 = vpack.c.b16 %v304, %v302
  %v329 = vpack.c.b16 %v307, %v305
  %v330 = vpack.c.b16 %v308, %v306
  %v331 = vpack.c.b16 %v311, %v309
  %v332 = vpack.c.b16 %v312, %v310
  %v333 = vpack.c.b16 %v315, %v313
  %v334 = vpack.c.b16 %v316, %v314
  %v335 = vpack.c.b16 %v319, %v317
  %v336 = vpack.c.b16 %v320, %v318
  %353 = vmatprep.subr.bf16.mxu0 %v336
  %354 = vmatpush1.bf16.msra.mxu0 %v335
  %355 = vmatprep.subr.bf16.mxu0 %v334
  %356 = vmatpush1.bf16.msra.mxu0 %v333
  %357 = vmatprep.subr.bf16.mxu0 %v332
  %358 = vmatpush1.bf16.msra.mxu0 %v331
  %359 = vmatprep.subr.bf16.mxu0 %v330
  %360 = vmatpush1.bf16.msra.mxu0 %v329
  %361 = vmatprep.subr.bf16.mxu0 %v328
  %362 = vmatpush1.bf16.msra.mxu0 %v327
  %363 = vmatprep.subr.bf16.mxu0 %v326
  %364 = vmatpush1.bf16.msra.mxu0 %v325
  %365 = vmatprep.subr.bf16.mxu0 %v324
  %366 = vmatpush1.bf16.msra.mxu0 %v323
  %367 = vmatprep.subr.bf16.mxu0 %v322
  %368 = vmatpush1.bf16.msra.mxu0 %v321
  %369 = vmatprep.subr.bf16.mxu0 0
  %370 = vmatpush2.bf16.msra.mxu0 0
  %371 = vmatprep.subr.bf16.mxu0 0
  %372 = vmatpush2.bf16.msra.mxu0 0
  %373 = vmatprep.subr.bf16.mxu0 0
  %374 = vmatpush2.bf16.msra.mxu0 0
  %375 = vmatprep.subr.bf16.mxu0 0
  %376 = vmatpush2.bf16.msra.mxu0 0
  %377 = vmatprep.subr.bf16.mxu0 0
  %378 = vmatpush2.bf16.msra.mxu0 0
  %379 = vmatprep.subr.bf16.mxu0 0
  %380 = vmatpush2.bf16.msra.mxu0 0
  %381 = vmatprep.subr.bf16.mxu0 0
  %382 = vmatpush2.bf16.msra.mxu0 0
  %383 = vmatprep.subr.bf16.mxu0 0
  %384 = vmatpush2.bf16.msra.mxu0 0
  %385 = vmatprep.mubr.bf16.mxu0 0
  %386 = vmatmul.mubr.bf16.gmra.mxu0 %v255
  %v387 = vpop.f32.mrf.mxu0
  %v388 = vadd.f32 0.0, %v387
  %v389 = vpop.f32.mrf.mxu0
  %v390 = vadd.f32 0.0, %v389
  %v391 = vpop.f32.mrf.mxu0
  %v392 = vadd.f32 0.0, %v391
  %v393 = vpop.f32.mrf.mxu0
  %v394 = vadd.f32 0.0, %v393
  %395 = vmatprep.mubr.bf16.mxu0 0
  %396 = vmatmul.mubr.bf16.gmra.mxu0 %v256
  %v397 = vpop.f32.mrf.mxu0
  %v398 = vadd.f32 0.0, %v397
  %v399 = vpop.f32.mrf.mxu0
  %v400 = vadd.f32 0.0, %v399
  %v401 = vpop.f32.mrf.mxu0
  %v402 = vadd.f32 0.0, %v401
  %v403 = vpop.f32.mrf.mxu0
  %v404 = vadd.f32 0.0, %v403
  %405 = vdwg.mxu0
  %v406 = vld [vmem:[%s3] sm:$0xff]
  %v407 = vld [vmem:[%s3 + $0x8] sm:$0xff]
  %v408 = vld [vmem:[%s3 + $0x50] sm:$0xff]
  %v409 = vld [vmem:[%s3 + $0x58] sm:$0xff]
  %v410 = vld [vmem:[%s3 + $0xa0] sm:$0xff]
  %v411 = vld [vmem:[%s3 + $0xa8] sm:$0xff]
  %v412 = vld [vmem:[%s3 + $0xf0] sm:$0xff]
  %v413 = vld [vmem:[%s3 + $0xf8] sm:$0xff]
  %v414 = vmul.f32 %v388, %v406
  %v415 = vmul.f32 %v390, %v407
  %v416 = vmul.f32 %v392, %v408
  %v417 = vmul.f32 %v394, %v409
  %v418 = vmul.f32 %v398, %v410
  %v419 = vmul.f32 %v400, %v411
  %v420 = vmul.f32 %v402, %v412
  %v421 = vmul.f32 %v404, %v413
  %v422 = vld [vmem:[%s4] sm:$0xff]
  %v423 = vld [vmem:[%s4 + $0x8] sm:$0xff]
  %v424 = vld [vmem:[%s4 + $0x10] sm:$0xff]
  %v425 = vld [vmem:[%s4 + $0x18] sm:$0xff]
  %v426 = vld [vmem:[%s4 + $0x20] sm:$0xff]
  %v427 = vld [vmem:[%s4 + $0x28] sm:$0xff]
  %v428 = vld [vmem:[%s4 + $0x30] sm:$0xff]
  %v429 = vld [vmem:[%s4 + $0x38] sm:$0xff]
  %v430 = vld [vmem:[%s4 + $0x40] sm:$0xff]
  %v431 = vld [vmem:[%s4 + $0x48] sm:$0xff]
  %v432 = vld [vmem:[%s4 + $0x50] sm:$0xff]
  %v433 = vld [vmem:[%s4 + $0x58] sm:$0xff]
  %v434 = vld [vmem:[%s4 + $0x60] sm:$0xff]
  %v435 = vld [vmem:[%s4 + $0x68] sm:$0xff]
  %v436 = vld [vmem:[%s4 + $0x70] sm:$0xff]
  %v437 = vld [vmem:[%s4 + $0x78] sm:$0xff]
  %v438 = vld [vmem:[%s4 + $0x80] sm:$0xff]
  %v439 = vld [vmem:[%s4 + $0x88] sm:$0xf]
  %vm440 = vcmask 97280
  %v442 = vsel %vm440, %v415, 0
  %v445 = vsel %vm440, %v417, 0
  %v448 = vsel %vm440, %v419, 0
  %v451 = vsel %vm440, %v421, 0
  %vm453 = vcmask 1043456
  %v455 = vsel %vm453, %v439, 0
  %457 = vmatprep.subr.mxu0 0.0
  %458 = vmatpush1.msra.mxu0 %v437
  %459 = vmatprep.subr.mxu0 0.0
  %460 = vmatpush1.msra.mxu0 %v436
  %461 = vmatprep.subr.mxu0 0.0
  %462 = vmatpush1.msra.mxu0 %v435
  %463 = vmatprep.subr.mxu0 0.0
  %464 = vmatpush1.msra.mxu0 %v434
  %465 = vmatprep.subr.mxu0 0.0
  %466 = vmatpush1.msra.mxu0 %v433
  %467 = vmatprep.subr.mxu0 0.0
  %468 = vmatpush1.msra.mxu0 %v432
  %469 = vmatprep.subr.mxu0 0.0
  %470 = vmatpush1.msra.mxu0 %v431
  %471 = vmatprep.subr.mxu0 0.0
  %472 = vmatpush1.msra.mxu0 %v430
  %473 = vmatprep.subr.mxu0 0.0
  %474 = vmatpush1.msra.mxu0 %v429
  %475 = vmatprep.subr.mxu0 0.0
  %476 = vmatpush1.msra.mxu0 %v428
  %477 = vmatprep.subr.mxu0 0.0
  %478 = vmatpush1.msra.mxu0 %v427
  %479 = vmatprep.subr.mxu0 0.0
  %480 = vmatpush1.msra.mxu0 %v426
  %481 = vmatprep.subr.mxu0 0.0
  %482 = vmatpush1.msra.mxu0 %v425
  %483 = vmatprep.subr.mxu0 0.0
  %484 = vmatpush1.msra.mxu0 %v424
  %485 = vmatprep.subr.mxu0 0.0
  %486 = vmatpush1.msra.mxu0 %v423
  %487 = vmatprep.subr.mxu0 0.0
  %488 = vmatpush1.msra.mxu0 %v422
  %489 = vmatprep.subr.mxu0 0.0
  %490 = vmatpush2.msra.mxu0 0.0
  %491 = vmatprep.subr.mxu0 0.0
  %492 = vmatpush2.msra.mxu0 0.0
  %493 = vmatprep.subr.mxu0 0.0
  %494 = vmatpush2.msra.mxu0 0.0
  %495 = vmatprep.subr.mxu0 0.0
  %496 = vmatpush2.msra.mxu0 0.0
  %497 = vmatprep.subr.mxu0 0.0
  %498 = vmatpush2.msra.mxu0 0.0
  %499 = vmatprep.subr.mxu0 0.0
  %500 = vmatpush2.msra.mxu0 0.0
  %501 = vmatprep.subr.mxu0 0.0
  %502 = vmatpush2.msra.mxu0 0.0
  %503 = vmatprep.subr.mxu0 0.0
  %504 = vmatpush2.msra.mxu0 0.0
  %505 = vmatprep.subr.mxu0 0.0
  %506 = vmatpush2.msra.mxu0 0.0
  %507 = vmatprep.subr.mxu0 0.0
  %508 = vmatpush2.msra.mxu0 0.0
  %509 = vmatprep.subr.mxu0 0.0
  %510 = vmatpush2.msra.mxu0 0.0
  %511 = vmatprep.subr.mxu0 0.0
  %512 = vmatpush2.msra.mxu0 0.0
  %513 = vmatprep.subr.mxu0 0.0
  %514 = vmatpush2.msra.mxu0 0.0
  %515 = vmatprep.subr.mxu0 0.0
  %516 = vmatpush2.msra.mxu0 0.0
  %517 = vmatprep.subr.mxu0 0.0
  %518 = vmatpush2.msra.mxu0 %v455
  %519 = vmatprep.subr.mxu0 0.0
  %520 = vmatpush2.msra.mxu0 %v438
  %521 = vmatprep.mubr.f32.mxu0 %v442
  %522 = vmatmul.mubr.f32.gmra.mxu0 %v414
  %v523 = vpop.f32.mrf.mxu0
  %v524 = vadd.f32 0.0, %v523
  %v525 = vpop.f32.mrf.mxu0
  %526 = vmatprep.mubr.f32.mxu0 %v445
  %527 = vmatmul.mubr.f32.gmra.mxu0 %v416
  %v528 = vpop.f32.mrf.mxu0
  %v529 = vadd.f32 0.0, %v528
  %v530 = vpop.f32.mrf.mxu0
  %531 = vmatprep.mubr.f32.mxu0 %v448
  %532 = vmatmul.mubr.f32.gmra.mxu0 %v418
  %v533 = vpop.f32.mrf.mxu0
  %v534 = vadd.f32 0.0, %v533
  %v535 = vpop.f32.mrf.mxu0
  %536 = vmatprep.mubr.f32.mxu0 %v451
  %537 = vmatmul.mubr.f32.gmra.mxu0 %v420
  %v538 = vpop.f32.mrf.mxu0
  %v539 = vadd.f32 0.0, %v538
  %v540 = vpop.f32.mrf.mxu0
  %541 = vdwg.mxu0
  %v542 = vld [vmem:[%s4 + $0x108] sm:$0x1]
  %v543 = vlaneseq
  %v544 = vshrl.u32 %v543, 7
  %v545 = vsub.s32 0, %v544
  %v546 = vrot.slane %v542, %v545
  %vm547 = vcmask 261120
  %v549 = vsel %vm547, %v22, 0
  %551 = vmatprep.subr.mxu0 0.0
  %552 = vmatpush1.msra.mxu0 0.0
  %553 = vmatprep.subr.mxu0 0.0
  %554 = vmatpush1.msra.mxu0 0.0
  %555 = vmatprep.subr.mxu0 0.0
  %556 = vmatpush1.msra.mxu0 0.0
  %557 = vmatprep.subr.mxu0 0.0
  %558 = vmatpush1.msra.mxu0 0.0
  %559 = vmatprep.subr.mxu0 0.0
  %560 = vmatpush1.msra.mxu0 0.0
  %561 = vmatprep.subr.mxu0 0.0
  %562 = vmatpush1.msra.mxu0 0.0
  %563 = vmatprep.subr.mxu0 0.0
  %564 = vmatpush1.msra.mxu0 0.0
  %565 = vmatprep.subr.mxu0 0.0
  %566 = vmatpush1.msra.mxu0 0.0
  %567 = vmatprep.subr.mxu0 0.0
  %568 = vmatpush1.msra.mxu0 0.0
  %569 = vmatprep.subr.mxu0 0.0
  %570 = vmatpush1.msra.mxu0 0.0
  %571 = vmatprep.subr.mxu0 0.0
  %572 = vmatpush1.msra.mxu0 0.0
  %573 = vmatprep.subr.mxu0 0.0
  %574 = vmatpush1.msra.mxu0 0.0
  %575 = vmatprep.subr.mxu0 0.0
  %576 = vmatpush1.msra.mxu0 %v539
  %577 = vmatprep.subr.mxu0 0.0
  %578 = vmatpush1.msra.mxu0 %v534
  %579 = vmatprep.subr.mxu0 0.0
  %580 = vmatpush1.msra.mxu0 %v529
  %581 = vmatprep.subr.mxu0 0.0
  %582 = vmatpush1.msra.mxu0 %v524
  %583 = vmatprep.subr.mxu0 0.0
  %584 = vmatpush2.msra.mxu0 0.0
  %585 = vmatprep.subr.mxu0 0.0
  %586 = vmatpush2.msra.mxu0 0.0
  %587 = vmatprep.subr.mxu0 0.0
  %588 = vmatpush2.msra.mxu0 0.0
  %589 = vmatprep.subr.mxu0 0.0
  %590 = vmatpush2.msra.mxu0 0.0
  %591 = vmatprep.subr.mxu0 0.0
  %592 = vmatpush2.msra.mxu0 0.0
  %593 = vmatprep.subr.mxu0 0.0
  %594 = vmatpush2.msra.mxu0 0.0
  %595 = vmatprep.subr.mxu0 0.0
  %596 = vmatpush2.msra.mxu0 0.0
  %597 = vmatprep.subr.mxu0 0.0
  %598 = vmatpush2.msra.mxu0 0.0
  %599 = vmatprep.subr.mxu0 0.0
  %600 = vmatpush2.msra.mxu0 0.0
  %601 = vmatprep.subr.mxu0 0.0
  %602 = vmatpush2.msra.mxu0 0.0
  %603 = vmatprep.subr.mxu0 0.0
  %604 = vmatpush2.msra.mxu0 0.0
  %605 = vmatprep.subr.mxu0 0.0
  %606 = vmatpush2.msra.mxu0 0.0
  %607 = vmatprep.subr.mxu0 0.0
  %608 = vmatpush2.msra.mxu0 0.0
  %609 = vmatprep.subr.mxu0 0.0
  %610 = vmatpush2.msra.mxu0 0.0
  %611 = vmatprep.subr.mxu0 0.0
  %612 = vmatpush2.msra.mxu0 0.0
  %613 = vmatprep.subr.mxu0 0.0
  %614 = vmatpush2.msra.mxu0 0.0
  %615 = vmatprep.mubr.f32.mxu0 0.0
  %616 = vmatmul.mubr.f32.gmra.mxu0 %v549
  %v617 = vpop.f32.mrf.mxu0
  %v618 = vadd.f32 %v546, %v617
  %v619 = vpop.f32.mrf.mxu0
  %620 = vdwg.mxu0
  %vm621 = vcmask 74752
  %622 = vst.msk [vmem:[%s5 + $0x40] sm:$0x3] %vm621, %v618
  %v627 = vrot.slane %v251, 1
  %v628 = vrot.slane %v252, 1
  %v629 = vsel %vm43, %v627, %v628
  %v630 = vrot.slane %v253, 1
  %v631 = vsel %vm43, %v628, %v630
  %v632 = vrot.slane %v254, 1
  %v633 = vsel %vm43, %v630, %v632
  %v638 = vsel %vm43, %v632, 0.0
  %v639 = vrot.slane %v251, 2
  %v640 = vrot.slane %v252, 2
  %v641 = vsel %vm53, %v639, %v640
  %v642 = vrot.slane %v253, 2
  %v643 = vsel %vm53, %v640, %v642
  %v644 = vrot.slane %v254, 2
  %v645 = vsel %vm53, %v642, %v644
  %v650 = vsel %vm53, %v644, 0.0
  %v651 = vpack.c.bf16 %v631, %v629
  %v652 = vpack.c.bf16 %v643, %v641
  %v653 = vpack.c.bf16 %v638, %v633
  %v654 = vpack.c.bf16 %v650, %v645
  %v655 = vld [vmem:[%s1 + $0x60] sm:$0xf]
  %v656 = vld [vmem:[%s1 + $0x64] sm:$0xf]
  %v657 = vld [vmem:[%s1 + $0x68] sm:$0xf]
  %v658 = vld [vmem:[%s1 + $0x6c] sm:$0xf]
  %v659 = vld [vmem:[%s1 + $0x70] sm:$0xf]
  %v660 = vld [vmem:[%s1 + $0x74] sm:$0xf]
  %v661 = vld [vmem:[%s1 + $0x78] sm:$0xf]
  %v662 = vld [vmem:[%s1 + $0x7c] sm:$0xf]
  %v663 = vld [vmem:[%s1 + $0x80] sm:$0xf]
  %v664 = vld [vmem:[%s1 + $0x84] sm:$0xf]
  %v665 = vld [vmem:[%s1 + $0x88] sm:$0xf]
  %v666 = vld [vmem:[%s1 + $0x8c] sm:$0xf]
  %v667 = vld [vmem:[%s1 + $0x90] sm:$0xf]
  %v668 = vld [vmem:[%s1 + $0x94] sm:$0xf]
  %v669 = vld [vmem:[%s1 + $0x98] sm:$0xf]
  %v670 = vld [vmem:[%s1 + $0x9c] sm:$0xf]
  %v671 = vld [vmem:[%s1 + $0xa0] sm:$0xf]
  %v672 = vld [vmem:[%s1 + $0xa4] sm:$0xf]
  %v673 = vld [vmem:[%s1 + $0xa8] sm:$0xf]
  %v674 = vld [vmem:[%s1 + $0xac] sm:$0xf]
  %v675 = vld [vmem:[%s1 + $0xb0] sm:$0xf]
  %v676 = vld [vmem:[%s1 + $0xb4] sm:$0xf]
  %v677 = vld [vmem:[%s1 + $0xb8] sm:$0xf]
  %v678 = vld [vmem:[%s1 + $0xbc] sm:$0xf]
  %v679 = vld [vmem:[%s1 + $0xc0] sm:$0xf]
  %v680 = vld [vmem:[%s1 + $0xc4] sm:$0xf]
  %v681 = vld [vmem:[%s1 + $0xc8] sm:$0xf]
  %v682 = vld [vmem:[%s1 + $0xcc] sm:$0xf]
  %v683 = vld [vmem:[%s1 + $0xd0] sm:$0xf]
  %v684 = vld [vmem:[%s1 + $0xd4] sm:$0xf]
  %v685 = vld [vmem:[%s1 + $0xd8] sm:$0xf]
  %v686 = vld [vmem:[%s1 + $0xdc] sm:$0xf]
  %v687 = vld [vmem:[%s1 + $0xe0] sm:$0xf]
  %v688 = vld [vmem:[%s1 + $0xe4] sm:$0xf]
  %v689 = vld [vmem:[%s1 + $0xe8] sm:$0xf]
  %v690 = vld [vmem:[%s1 + $0xec] sm:$0xf]
  %v691 = vld [vmem:[%s1 + $0xf0] sm:$0xf]
  %v692 = vld [vmem:[%s1 + $0xf4] sm:$0xf]
  %v693 = vld [vmem:[%s1 + $0xf8] sm:$0xf]
  %v694 = vld [vmem:[%s1 + $0xfc] sm:$0xf]
  %v695 = vld [vmem:[%s1 + $0x100] sm:$0xf]
  %v696 = vld [vmem:[%s1 + $0x104] sm:$0xf]
  %v697 = vld [vmem:[%s1 + $0x108] sm:$0xf]
  %v698 = vld [vmem:[%s1 + $0x10c] sm:$0xf]
  %v699 = vld [vmem:[%s1 + $0x110] sm:$0xf]
  %v700 = vld [vmem:[%s1 + $0x114] sm:$0xf]
  %v701 = vld [vmem:[%s1 + $0x118] sm:$0xf]
  %v702 = vld [vmem:[%s1 + $0x11c] sm:$0xf]
  %v751 = vunpack.c.l.b16 %v655
  %v752 = vunpack.c.l.b16 %v656
  %v753 = vunpack.c.l.b16 %v657
  %v754 = vunpack.c.l.b16 %v658
  %v755 = vunpack.c.l.b16 %v659
  %v756 = vunpack.c.l.b16 %v660
  %v757 = vunpack.c.l.b16 %v661
  %v758 = vunpack.c.l.b16 %v662
  %v759 = vunpack.c.l.b16 %v663
  %v760 = vunpack.c.l.b16 %v664
  %v761 = vunpack.c.l.b16 %v665
  %v762 = vunpack.c.l.b16 %v666
  %v763 = vunpack.c.l.b16 %v667
  %v764 = vunpack.c.l.b16 %v668
  %v765 = vunpack.c.l.b16 %v669
  %v766 = vunpack.c.l.b16 %v670
  %v767 = vunpack.c.l.b16 %v671
  %v768 = vunpack.c.l.b16 %v672
  %v769 = vunpack.c.l.b16 %v673
  %v770 = vunpack.c.l.b16 %v674
  %v771 = vunpack.c.l.b16 %v675
  %v772 = vunpack.c.l.b16 %v676
  %v773 = vunpack.c.l.b16 %v677
  %v774 = vunpack.c.l.b16 %v678
  %v775 = vunpack.c.l.b16 %v679
  %v776 = vunpack.c.l.b16 %v680
  %v777 = vunpack.c.l.b16 %v681
  %v778 = vunpack.c.l.b16 %v682
  %v779 = vunpack.c.l.b16 %v683
  %v780 = vunpack.c.l.b16 %v684
  %v781 = vunpack.c.l.b16 %v685
  %v782 = vunpack.c.l.b16 %v686
  %v783 = vunpack.c.l.b16 %v687
  %v784 = vunpack.c.l.b16 %v688
  %v785 = vunpack.c.l.b16 %v689
  %v786 = vunpack.c.l.b16 %v690
  %v787 = vunpack.c.l.b16 %v691
  %v788 = vunpack.c.l.b16 %v692
  %v789 = vunpack.c.l.b16 %v693
  %v790 = vunpack.c.l.b16 %v694
  %v791 = vunpack.c.l.b16 %v695
  %v792 = vunpack.c.l.b16 %v696
  %v793 = vunpack.c.l.b16 %v697
  %v794 = vunpack.c.l.b16 %v698
  %v795 = vunpack.c.l.b16 %v699
  %v796 = vunpack.c.l.b16 %v700
  %v797 = vunpack.c.l.b16 %v701
  %v798 = vunpack.c.l.b16 %v702
  %v799 = vpack.c.b16 %v752, %v751
  %v800 = vpack.c.b16 %v754, %v753
  %v801 = vpack.c.b16 %v756, %v755
  %v802 = vpack.c.b16 %v758, %v757
  %v803 = vpack.c.b16 %v760, %v759
  %v804 = vpack.c.b16 %v762, %v761
  %v805 = vpack.c.b16 %v764, %v763
  %v806 = vpack.c.b16 %v766, %v765
  %v807 = vpack.c.b16 %v768, %v767
  %v808 = vpack.c.b16 %v770, %v769
  %v809 = vpack.c.b16 %v772, %v771
  %v810 = vpack.c.b16 %v774, %v773
  %v811 = vpack.c.b16 %v776, %v775
  %v812 = vpack.c.b16 %v778, %v777
  %v813 = vpack.c.b16 %v780, %v779
  %v814 = vpack.c.b16 %v782, %v781
  %v815 = vpack.c.b16 %v784, %v783
  %v816 = vpack.c.b16 %v786, %v785
  %v817 = vpack.c.b16 %v788, %v787
  %v818 = vpack.c.b16 %v790, %v789
  %v819 = vpack.c.b16 %v792, %v791
  %v820 = vpack.c.b16 %v794, %v793
  %v821 = vpack.c.b16 %v796, %v795
  %v822 = vpack.c.b16 %v798, %v797
  %847 = vmatprep.subr.bf16.mxu0 0
  %848 = vmatpush1.bf16.msra.mxu0 %v806
  %849 = vmatprep.subr.bf16.mxu0 0
  %850 = vmatpush1.bf16.msra.mxu0 %v805
  %851 = vmatprep.subr.bf16.mxu0 0
  %852 = vmatpush1.bf16.msra.mxu0 %v804
  %853 = vmatprep.subr.bf16.mxu0 0
  %854 = vmatpush1.bf16.msra.mxu0 %v803
  %855 = vmatprep.subr.bf16.mxu0 0
  %856 = vmatpush1.bf16.msra.mxu0 %v802
  %857 = vmatprep.subr.bf16.mxu0 0
  %858 = vmatpush1.bf16.msra.mxu0 %v801
  %859 = vmatprep.subr.bf16.mxu0 0
  %860 = vmatpush1.bf16.msra.mxu0 %v800
  %861 = vmatprep.subr.bf16.mxu0 0
  %862 = vmatpush1.bf16.msra.mxu0 %v799
  %863 = vmatprep.subr.bf16.mxu0 0
  %864 = vmatpush2.bf16.msra.mxu0 %v814
  %865 = vmatprep.subr.bf16.mxu0 0
  %866 = vmatpush2.bf16.msra.mxu0 %v813
  %867 = vmatprep.subr.bf16.mxu0 0
  %868 = vmatpush2.bf16.msra.mxu0 %v812
  %869 = vmatprep.subr.bf16.mxu0 0
  %870 = vmatpush2.bf16.msra.mxu0 %v811
  %871 = vmatprep.subr.bf16.mxu0 0
  %872 = vmatpush2.bf16.msra.mxu0 %v810
  %873 = vmatprep.subr.bf16.mxu0 0
  %874 = vmatpush2.bf16.msra.mxu0 %v809
  %875 = vmatprep.subr.bf16.mxu0 0
  %876 = vmatpush2.bf16.msra.mxu0 %v808
  %877 = vmatprep.subr.bf16.mxu0 0
  %878 = vmatpush2.bf16.msra.mxu0 %v807
  %879 = vmatprep.mubr.bf16.mxu0 %v651
  %880 = vmatmul.mubr.bf16.gmra.mxu0 %v255
  %v881 = vpop.f32.mrf.mxu0
  %v882 = vadd.f32 0.0, %v881
  %v883 = vpop.f32.mrf.mxu0
  %v884 = vpop.f32.mrf.mxu0
  %v885 = vadd.f32 0.0, %v884
  %v886 = vpop.f32.mrf.mxu0
  %887 = vmatprep.mubr.bf16.mxu0 %v653
  %888 = vmatmul.mubr.bf16.gmra.mxu0 %v256
  %v889 = vpop.f32.mrf.mxu0
  %v890 = vadd.f32 0.0, %v889
  %v891 = vpop.f32.mrf.mxu0
  %v892 = vpop.f32.mrf.mxu0
  %v893 = vadd.f32 0.0, %v892
  %v894 = vpop.f32.mrf.mxu0
  %895 = vdwg.mxu0
  %896 = vmatprep.subr.bf16.mxu0 0
  %897 = vmatpush1.bf16.msra.mxu0 %v822
  %898 = vmatprep.subr.bf16.mxu0 0
  %899 = vmatpush1.bf16.msra.mxu0 %v821
  %900 = vmatprep.subr.bf16.mxu0 0
  %901 = vmatpush1.bf16.msra.mxu0 %v820
  %902 = vmatprep.subr.bf16.mxu0 0
  %903 = vmatpush1.bf16.msra.mxu0 %v819
  %904 = vmatprep.subr.bf16.mxu0 0
  %905 = vmatpush1.bf16.msra.mxu0 %v818
  %906 = vmatprep.subr.bf16.mxu0 0
  %907 = vmatpush1.bf16.msra.mxu0 %v817
  %908 = vmatprep.subr.bf16.mxu0 0
  %909 = vmatpush1.bf16.msra.mxu0 %v816
  %910 = vmatprep.subr.bf16.mxu0 0
  %911 = vmatpush1.bf16.msra.mxu0 %v815
  %912 = vmatprep.subr.bf16.mxu0 0
  %913 = vmatpush2.bf16.msra.mxu0 0
  %914 = vmatprep.subr.bf16.mxu0 0
  %915 = vmatpush2.bf16.msra.mxu0 0
  %916 = vmatprep.subr.bf16.mxu0 0
  %917 = vmatpush2.bf16.msra.mxu0 0
  %918 = vmatprep.subr.bf16.mxu0 0
  %919 = vmatpush2.bf16.msra.mxu0 0
  %920 = vmatprep.subr.bf16.mxu0 0
  %921 = vmatpush2.bf16.msra.mxu0 0
  %922 = vmatprep.subr.bf16.mxu0 0
  %923 = vmatpush2.bf16.msra.mxu0 0
  %924 = vmatprep.subr.bf16.mxu0 0
  %925 = vmatpush2.bf16.msra.mxu0 0
  %926 = vmatprep.subr.bf16.mxu0 0
  %927 = vmatpush2.bf16.msra.mxu0 0
  %928 = vmatprep.mubr.bf16.mxu0 0
  %929 = vmatmul.mubr.bf16.gmra.mxu0 %v652
  %v930 = vpop.f32.mrf.mxu0
  %v931 = vadd.f32 %v882, %v930
  %v932 = vpop.f32.mrf.mxu0
  %v933 = vpop.f32.mrf.mxu0
  %v934 = vadd.f32 %v885, %v933
  %v935 = vpop.f32.mrf.mxu0
  %936 = vmatprep.mubr.bf16.mxu0 0
  %937 = vmatmul.mubr.bf16.gmra.mxu0 %v654
  %v938 = vpop.f32.mrf.mxu0
  %v939 = vadd.f32 %v890, %v938
  %v940 = vpop.f32.mrf.mxu0
  %v941 = vpop.f32.mrf.mxu0
  %v942 = vadd.f32 %v893, %v941
  %v943 = vpop.f32.mrf.mxu0
  %944 = vdwg.mxu0
  %945 = vst [vmem:[%s5 + $0x20] sm:$0xff] %v931
  %946 = vst [vmem:[%s5 + $0x28] sm:$0xff] %v934
  %947 = vst [vmem:[%s5 + $0x30] sm:$0xff] %v939
  %948 = vst [vmem:[%s5 + $0x38] sm:$0xff] %v942
  %vm949 = vcmp.ge.f32.partialorder %v931, 0.25
  %vm950 = vcmp.ge.f32.partialorder %v934, 0.25
  %vm951 = vcmp.ge.f32.partialorder %v939, 0.25
  %vm952 = vcmp.ge.f32.partialorder %v942, 0.25
  %v953 = vsel %vm949, 1, 0
  %v954 = vsel %vm950, 1, 0
  %v955 = vsel %vm951, 1, 0
  %v956 = vsel %vm952, 1, 0
  %v957 = vcvt.s32.f32 %v953
  %v958 = vcvt.s32.f32 %v954
  %v959 = vcvt.s32.f32 %v955
  %v960 = vcvt.s32.f32 %v956
  %v961 = vpack.c.bf16 %v958, %v957
  %v962 = vpack.c.bf16 %v960, %v959
  %v963 = vld [vmem:[%s2 + $0x8] sm:$0xff]
  %v964 = vld [vmem:[%s2 + $0x10] sm:$0xff]
  %v965 = vld [vmem:[%s2 + $0x18] sm:$0xff]
  %v966 = vld [vmem:[%s2 + $0x20] sm:$0xf]
  %v967 = vld [vmem:[%s2 + $0x30] sm:$0xff]
  %v968 = vld [vmem:[%s2 + $0x38] sm:$0xff]
  %v969 = vld [vmem:[%s2 + $0x40] sm:$0xff]
  %v970 = vld [vmem:[%s2 + $0x48] sm:$0xf]
  %v971 = vld [vmem:[%s2 + $0x58] sm:$0xff]
  %v972 = vld [vmem:[%s2 + $0x60] sm:$0xff]
  %v973 = vld [vmem:[%s2 + $0x68] sm:$0xff]
  %v974 = vld [vmem:[%s2 + $0x70] sm:$0xf]
  %v975 = vld [vmem:[%s2 + $0x80] sm:$0xff]
  %v976 = vld [vmem:[%s2 + $0x88] sm:$0xff]
  %v977 = vld [vmem:[%s2 + $0x90] sm:$0xff]
  %v978 = vld [vmem:[%s2 + $0x98] sm:$0xf]
  %v979 = vld [vmem:[%s2 + $0xa8] sm:$0xff]
  %v980 = vld [vmem:[%s2 + $0xb0] sm:$0xff]
  %v981 = vld [vmem:[%s2 + $0xb8] sm:$0xff]
  %v982 = vld [vmem:[%s2 + $0xc0] sm:$0xf]
  %v983 = vld [vmem:[%s2 + $0xd0] sm:$0xff]
  %v984 = vld [vmem:[%s2 + $0xd8] sm:$0xff]
  %v985 = vld [vmem:[%s2 + $0xe0] sm:$0xff]
  %v986 = vld [vmem:[%s2 + $0xe8] sm:$0xf]
  %v987 = vld [vmem:[%s2 + $0xf8] sm:$0xff]
  %v988 = vld [vmem:[%s2 + $0x100] sm:$0xff]
  %v989 = vld [vmem:[%s2 + $0x108] sm:$0xff]
  %v990 = vld [vmem:[%s2 + $0x110] sm:$0xf]
  %v991 = vld [vmem:[%s2 + $0x120] sm:$0xff]
  %v992 = vld [vmem:[%s2 + $0x128] sm:$0xff]
  %v993 = vld [vmem:[%s2 + $0x130] sm:$0xff]
  %v994 = vld [vmem:[%s2 + $0x138] sm:$0xf]
  %v995 = vld [vmem:[%s2 + $0x148] sm:$0xff]
  %v996 = vld [vmem:[%s2 + $0x150] sm:$0xff]
  %v997 = vld [vmem:[%s2 + $0x158] sm:$0xff]
  %v998 = vld [vmem:[%s2 + $0x160] sm:$0xf]
  %v999 = vld [vmem:[%s2 + $0x170] sm:$0xff]
  %v1000 = vld [vmem:[%s2 + $0x178] sm:$0xff]
  %v1001 = vld [vmem:[%s2 + $0x180] sm:$0xff]
  %v1002 = vld [vmem:[%s2 + $0x188] sm:$0xf]
  %v1003 = vld [vmem:[%s2 + $0x198] sm:$0xff]
  %v1004 = vld [vmem:[%s2 + $0x1a0] sm:$0xff]
  %v1005 = vld [vmem:[%s2 + $0x1a8] sm:$0xff]
  %v1006 = vld [vmem:[%s2 + $0x1b0] sm:$0xf]
  %v1007 = vld [vmem:[%s2 + $0x1c0] sm:$0xff]
  %v1008 = vld [vmem:[%s2 + $0x1c8] sm:$0xff]
  %v1009 = vld [vmem:[%s2 + $0x1d0] sm:$0xff]
  %v1010 = vld [vmem:[%s2 + $0x1d8] sm:$0xf]
  %v1011 = vld [vmem:[%s2 + $0x1e8] sm:$0xff]
  %v1012 = vld [vmem:[%s2 + $0x1f0] sm:$0xff]
  %v1013 = vld [vmem:[%s2 + $0x1f8] sm:$0xff]
  %v1014 = vld [vmem:[%s2 + $0x200] sm:$0xf]
  %v1015 = vld [vmem:[%s2 + $0x210] sm:$0xff]
  %v1016 = vld [vmem:[%s2 + $0x218] sm:$0xff]
  %v1017 = vld [vmem:[%s2 + $0x220] sm:$0xff]
  %v1018 = vld [vmem:[%s2 + $0x228] sm:$0xf]
  %v1019 = vld [vmem:[%s2 + $0x238] sm:$0xff]
  %v1020 = vld [vmem:[%s2 + $0x240] sm:$0xff]
  %v1021 = vld [vmem:[%s2 + $0x248] sm:$0xff]
  %v1022 = vld [vmem:[%s2 + $0x250] sm:$0xf]
  %v1023 = vld [vmem:[%s2 + $0x260] sm:$0xff]
  %v1024 = vld [vmem:[%s2 + $0x268] sm:$0xff]
  %v1025 = vld [vmem:[%s2 + $0x270] sm:$0xff]
  %v1026 = vld [vmem:[%s2 + $0x278] sm:$0xf]
  %v1091 = vunpack.c.l.b16 %v963
  %v1092 = vunpack.c.h.b16 %v963
  %v1093 = vunpack.c.l.b16 %v964
  %v1094 = vunpack.c.h.b16 %v964
  %v1095 = vunpack.c.l.b16 %v965
  %v1096 = vunpack.c.h.b16 %v965
  %v1097 = vunpack.c.l.b16 %v966
  %v1098 = vunpack.c.l.b16 %v967
  %v1099 = vunpack.c.h.b16 %v967
  %v1100 = vunpack.c.l.b16 %v968
  %v1101 = vunpack.c.h.b16 %v968
  %v1102 = vunpack.c.l.b16 %v969
  %v1103 = vunpack.c.h.b16 %v969
  %v1104 = vunpack.c.l.b16 %v970
  %v1105 = vunpack.c.l.b16 %v971
  %v1106 = vunpack.c.h.b16 %v971
  %v1107 = vunpack.c.l.b16 %v972
  %v1108 = vunpack.c.h.b16 %v972
  %v1109 = vunpack.c.l.b16 %v973
  %v1110 = vunpack.c.h.b16 %v973
  %v1111 = vunpack.c.l.b16 %v974
  %v1112 = vunpack.c.l.b16 %v975
  %v1113 = vunpack.c.h.b16 %v975
  %v1114 = vunpack.c.l.b16 %v976
  %v1115 = vunpack.c.h.b16 %v976
  %v1116 = vunpack.c.l.b16 %v977
  %v1117 = vunpack.c.h.b16 %v977
  %v1118 = vunpack.c.l.b16 %v978
  %v1119 = vunpack.c.l.b16 %v979
  %v1120 = vunpack.c.h.b16 %v979
  %v1121 = vunpack.c.l.b16 %v980
  %v1122 = vunpack.c.h.b16 %v980
  %v1123 = vunpack.c.l.b16 %v981
  %v1124 = vunpack.c.h.b16 %v981
  %v1125 = vunpack.c.l.b16 %v982
  %v1126 = vunpack.c.l.b16 %v983
  %v1127 = vunpack.c.h.b16 %v983
  %v1128 = vunpack.c.l.b16 %v984
  %v1129 = vunpack.c.h.b16 %v984
  %v1130 = vunpack.c.l.b16 %v985
  %v1131 = vunpack.c.h.b16 %v985
  %v1132 = vunpack.c.l.b16 %v986
  %v1133 = vunpack.c.l.b16 %v987
  %v1134 = vunpack.c.h.b16 %v987
  %v1135 = vunpack.c.l.b16 %v988
  %v1136 = vunpack.c.h.b16 %v988
  %v1137 = vunpack.c.l.b16 %v989
  %v1138 = vunpack.c.h.b16 %v989
  %v1139 = vunpack.c.l.b16 %v990
  %v1140 = vunpack.c.l.b16 %v991
  %v1141 = vunpack.c.h.b16 %v991
  %v1142 = vunpack.c.l.b16 %v992
  %v1143 = vunpack.c.h.b16 %v992
  %v1144 = vunpack.c.l.b16 %v993
  %v1145 = vunpack.c.h.b16 %v993
  %v1146 = vunpack.c.l.b16 %v994
  %v1147 = vunpack.c.l.b16 %v995
  %v1148 = vunpack.c.h.b16 %v995
  %v1149 = vunpack.c.l.b16 %v996
  %v1150 = vunpack.c.h.b16 %v996
  %v1151 = vunpack.c.l.b16 %v997
  %v1152 = vunpack.c.h.b16 %v997
  %v1153 = vunpack.c.l.b16 %v998
  %v1154 = vunpack.c.l.b16 %v999
  %v1155 = vunpack.c.h.b16 %v999
  %v1156 = vunpack.c.l.b16 %v1000
  %v1157 = vunpack.c.h.b16 %v1000
  %v1158 = vunpack.c.l.b16 %v1001
  %v1159 = vunpack.c.h.b16 %v1001
  %v1160 = vunpack.c.l.b16 %v1002
  %v1161 = vunpack.c.l.b16 %v1003
  %v1162 = vunpack.c.h.b16 %v1003
  %v1163 = vunpack.c.l.b16 %v1004
  %v1164 = vunpack.c.h.b16 %v1004
  %v1165 = vunpack.c.l.b16 %v1005
  %v1166 = vunpack.c.h.b16 %v1005
  %v1167 = vunpack.c.l.b16 %v1006
  %v1168 = vunpack.c.l.b16 %v1007
  %v1169 = vunpack.c.h.b16 %v1007
  %v1170 = vunpack.c.l.b16 %v1008
  %v1171 = vunpack.c.h.b16 %v1008
  %v1172 = vunpack.c.l.b16 %v1009
  %v1173 = vunpack.c.h.b16 %v1009
  %v1174 = vunpack.c.l.b16 %v1010
  %v1175 = vunpack.c.l.b16 %v1011
  %v1176 = vunpack.c.h.b16 %v1011
  %v1177 = vunpack.c.l.b16 %v1012
  %v1178 = vunpack.c.h.b16 %v1012
  %v1179 = vunpack.c.l.b16 %v1013
  %v1180 = vunpack.c.h.b16 %v1013
  %v1181 = vunpack.c.l.b16 %v1014
  %v1182 = vunpack.c.l.b16 %v1015
  %v1183 = vunpack.c.h.b16 %v1015
  %v1184 = vunpack.c.l.b16 %v1016
  %v1185 = vunpack.c.h.b16 %v1016
  %v1186 = vunpack.c.l.b16 %v1017
  %v1187 = vunpack.c.h.b16 %v1017
  %v1188 = vunpack.c.l.b16 %v1018
  %v1189 = vunpack.c.l.b16 %v1019
  %v1190 = vunpack.c.h.b16 %v1019
  %v1191 = vunpack.c.l.b16 %v1020
  %v1192 = vunpack.c.h.b16 %v1020
  %v1193 = vunpack.c.l.b16 %v1021
  %v1194 = vunpack.c.h.b16 %v1021
  %v1195 = vunpack.c.l.b16 %v1022
  %v1196 = vunpack.c.l.b16 %v1023
  %v1197 = vunpack.c.h.b16 %v1023
  %v1198 = vunpack.c.l.b16 %v1024
  %v1199 = vunpack.c.h.b16 %v1024
  %v1200 = vunpack.c.l.b16 %v1025
  %v1201 = vunpack.c.h.b16 %v1025
  %v1202 = vunpack.c.l.b16 %v1026
  %v1203 = vpack.c.b16 %v1098, %v1091
  %v1204 = vpack.c.b16 %v1099, %v1092
  %v1205 = vpack.c.b16 %v1100, %v1093
  %v1206 = vpack.c.b16 %v1101, %v1094
  %v1207 = vpack.c.b16 %v1102, %v1095
  %v1208 = vpack.c.b16 %v1103, %v1096
  %v1209 = vpack.c.b16 %v1104, %v1097
  %v1210 = vpack.c.b16 %v1112, %v1105
  %v1211 = vpack.c.b16 %v1113, %v1106
  %v1212 = vpack.c.b16 %v1114, %v1107
  %v1213 = vpack.c.b16 %v1115, %v1108
  %v1214 = vpack.c.b16 %v1116, %v1109
  %v1215 = vpack.c.b16 %v1117, %v1110
  %v1216 = vpack.c.b16 %v1118, %v1111
  %v1217 = vpack.c.b16 %v1126, %v1119
  %v1218 = vpack.c.b16 %v1127, %v1120
  %v1219 = vpack.c.b16 %v1128, %v1121
  %v1220 = vpack.c.b16 %v1129, %v1122
  %v1221 = vpack.c.b16 %v1130, %v1123
  %v1222 = vpack.c.b16 %v1131, %v1124
  %v1223 = vpack.c.b16 %v1132, %v1125
  %v1224 = vpack.c.b16 %v1140, %v1133
  %v1225 = vpack.c.b16 %v1141, %v1134
  %v1226 = vpack.c.b16 %v1142, %v1135
  %v1227 = vpack.c.b16 %v1143, %v1136
  %v1228 = vpack.c.b16 %v1144, %v1137
  %v1229 = vpack.c.b16 %v1145, %v1138
  %v1230 = vpack.c.b16 %v1146, %v1139
  %v1231 = vpack.c.b16 %v1154, %v1147
  %v1232 = vpack.c.b16 %v1155, %v1148
  %v1233 = vpack.c.b16 %v1156, %v1149
  %v1234 = vpack.c.b16 %v1157, %v1150
  %v1235 = vpack.c.b16 %v1158, %v1151
  %v1236 = vpack.c.b16 %v1159, %v1152
  %v1237 = vpack.c.b16 %v1160, %v1153
  %v1238 = vpack.c.b16 %v1168, %v1161
  %v1239 = vpack.c.b16 %v1169, %v1162
  %v1240 = vpack.c.b16 %v1170, %v1163
  %v1241 = vpack.c.b16 %v1171, %v1164
  %v1242 = vpack.c.b16 %v1172, %v1165
  %v1243 = vpack.c.b16 %v1173, %v1166
  %v1244 = vpack.c.b16 %v1174, %v1167
  %v1245 = vpack.c.b16 %v1182, %v1175
  %v1246 = vpack.c.b16 %v1183, %v1176
  %v1247 = vpack.c.b16 %v1184, %v1177
  %v1248 = vpack.c.b16 %v1185, %v1178
  %v1249 = vpack.c.b16 %v1186, %v1179
  %v1250 = vpack.c.b16 %v1187, %v1180
  %v1251 = vpack.c.b16 %v1188, %v1181
  %v1252 = vpack.c.b16 %v1196, %v1189
  %v1253 = vpack.c.b16 %v1197, %v1190
  %v1254 = vpack.c.b16 %v1198, %v1191
  %v1255 = vpack.c.b16 %v1199, %v1192
  %v1256 = vpack.c.b16 %v1200, %v1193
  %v1257 = vpack.c.b16 %v1201, %v1194
  %v1258 = vpack.c.b16 %v1202, %v1195
  %1315 = vmatprep.subr.bf16.mxu0 %v1253
  %1316 = vmatpush1.bf16.msra.mxu0 %v1252
  %1317 = vmatprep.subr.bf16.mxu0 %v1246
  %1318 = vmatpush1.bf16.msra.mxu0 %v1245
  %1319 = vmatprep.subr.bf16.mxu0 %v1239
  %1320 = vmatpush1.bf16.msra.mxu0 %v1238
  %1321 = vmatprep.subr.bf16.mxu0 %v1232
  %1322 = vmatpush1.bf16.msra.mxu0 %v1231
  %1323 = vmatprep.subr.bf16.mxu0 %v1225
  %1324 = vmatpush1.bf16.msra.mxu0 %v1224
  %1325 = vmatprep.subr.bf16.mxu0 %v1218
  %1326 = vmatpush1.bf16.msra.mxu0 %v1217
  %1327 = vmatprep.subr.bf16.mxu0 %v1211
  %1328 = vmatpush1.bf16.msra.mxu0 %v1210
  %1329 = vmatprep.subr.bf16.mxu0 %v1204
  %1330 = vmatpush1.bf16.msra.mxu0 %v1203
  %1331 = vmatprep.subr.bf16.mxu0 0
  %1332 = vmatpush2.bf16.msra.mxu0 0
  %1333 = vmatprep.subr.bf16.mxu0 0
  %1334 = vmatpush2.bf16.msra.mxu0 0
  %1335 = vmatprep.subr.bf16.mxu0 0
  %1336 = vmatpush2.bf16.msra.mxu0 0
  %1337 = vmatprep.subr.bf16.mxu0 0
  %1338 = vmatpush2.bf16.msra.mxu0 0
  %1339 = vmatprep.subr.bf16.mxu0 0
  %1340 = vmatpush2.bf16.msra.mxu0 0
  %1341 = vmatprep.subr.bf16.mxu0 0
  %1342 = vmatpush2.bf16.msra.mxu0 0
  %1343 = vmatprep.subr.bf16.mxu0 0
  %1344 = vmatpush2.bf16.msra.mxu0 0
  %1345 = vmatprep.subr.bf16.mxu0 0
  %1346 = vmatpush2.bf16.msra.mxu0 0
  %1347 = vmatprep.mubr.bf16.mxu0 0
  %1348 = vmatmul.mubr.bf16.gmra.mxu0 %v961
  %v1349 = vpop.f32.mrf.mxu0
  %v1350 = vadd.f32 0.0, %v1349
  %v1351 = vpop.f32.mrf.mxu0
  %v1352 = vadd.f32 0.0, %v1351
  %v1353 = vpop.f32.mrf.mxu0
  %v1354 = vadd.f32 0.0, %v1353
  %v1355 = vpop.f32.mrf.mxu0
  %v1356 = vadd.f32 0.0, %v1355
  %1357 = vmatprep.mubr.bf16.mxu0 0
  %1358 = vmatmul.mubr.bf16.gmra.mxu0 %v962
  %v1359 = vpop.f32.mrf.mxu0
  %v1360 = vadd.f32 0.0, %v1359
  %v1361 = vpop.f32.mrf.mxu0
  %v1362 = vadd.f32 0.0, %v1361
  %v1363 = vpop.f32.mrf.mxu0
  %v1364 = vadd.f32 0.0, %v1363
  %v1365 = vpop.f32.mrf.mxu0
  %v1366 = vadd.f32 0.0, %v1365
  %1367 = vdwg.mxu0
  %1368 = vmatprep.subr.bf16.mxu0 %v1255
  %1369 = vmatpush1.bf16.msra.mxu0 %v1254
  %1370 = vmatprep.subr.bf16.mxu0 %v1248
  %1371 = vmatpush1.bf16.msra.mxu0 %v1247
  %1372 = vmatprep.subr.bf16.mxu0 %v1241
  %1373 = vmatpush1.bf16.msra.mxu0 %v1240
  %1374 = vmatprep.subr.bf16.mxu0 %v1234
  %1375 = vmatpush1.bf16.msra.mxu0 %v1233
  %1376 = vmatprep.subr.bf16.mxu0 %v1227
  %1377 = vmatpush1.bf16.msra.mxu0 %v1226
  %1378 = vmatprep.subr.bf16.mxu0 %v1220
  %1379 = vmatpush1.bf16.msra.mxu0 %v1219
  %1380 = vmatprep.subr.bf16.mxu0 %v1213
  %1381 = vmatpush1.bf16.msra.mxu0 %v1212
  %1382 = vmatprep.subr.bf16.mxu0 %v1206
  %1383 = vmatpush1.bf16.msra.mxu0 %v1205
  %1384 = vmatprep.subr.bf16.mxu0 0
  %1385 = vmatpush2.bf16.msra.mxu0 0
  %1386 = vmatprep.subr.bf16.mxu0 0
  %1387 = vmatpush2.bf16.msra.mxu0 0
  %1388 = vmatprep.subr.bf16.mxu0 0
  %1389 = vmatpush2.bf16.msra.mxu0 0
  %1390 = vmatprep.subr.bf16.mxu0 0
  %1391 = vmatpush2.bf16.msra.mxu0 0
  %1392 = vmatprep.subr.bf16.mxu0 0
  %1393 = vmatpush2.bf16.msra.mxu0 0
  %1394 = vmatprep.subr.bf16.mxu0 0
  %1395 = vmatpush2.bf16.msra.mxu0 0
  %1396 = vmatprep.subr.bf16.mxu0 0
  %1397 = vmatpush2.bf16.msra.mxu0 0
  %1398 = vmatprep.subr.bf16.mxu0 0
  %1399 = vmatpush2.bf16.msra.mxu0 0
  %1400 = vmatprep.mubr.bf16.mxu0 0
  %1401 = vmatmul.mubr.bf16.gmra.mxu0 %v961
  %v1402 = vpop.f32.mrf.mxu0
  %v1403 = vadd.f32 0.0, %v1402
  %v1404 = vpop.f32.mrf.mxu0
  %v1405 = vadd.f32 0.0, %v1404
  %v1406 = vpop.f32.mrf.mxu0
  %v1407 = vadd.f32 0.0, %v1406
  %v1408 = vpop.f32.mrf.mxu0
  %v1409 = vadd.f32 0.0, %v1408
  %1410 = vmatprep.mubr.bf16.mxu0 0
  %1411 = vmatmul.mubr.bf16.gmra.mxu0 %v962
  %v1412 = vpop.f32.mrf.mxu0
  %v1413 = vadd.f32 0.0, %v1412
  %v1414 = vpop.f32.mrf.mxu0
  %v1415 = vadd.f32 0.0, %v1414
  %v1416 = vpop.f32.mrf.mxu0
  %v1417 = vadd.f32 0.0, %v1416
  %v1418 = vpop.f32.mrf.mxu0
  %v1419 = vadd.f32 0.0, %v1418
  %1420 = vdwg.mxu0
  %1421 = vmatprep.subr.bf16.mxu0 %v1257
  %1422 = vmatpush1.bf16.msra.mxu0 %v1256
  %1423 = vmatprep.subr.bf16.mxu0 %v1250
  %1424 = vmatpush1.bf16.msra.mxu0 %v1249
  %1425 = vmatprep.subr.bf16.mxu0 %v1243
  %1426 = vmatpush1.bf16.msra.mxu0 %v1242
  %1427 = vmatprep.subr.bf16.mxu0 %v1236
  %1428 = vmatpush1.bf16.msra.mxu0 %v1235
  %1429 = vmatprep.subr.bf16.mxu0 %v1229
  %1430 = vmatpush1.bf16.msra.mxu0 %v1228
  %1431 = vmatprep.subr.bf16.mxu0 %v1222
  %1432 = vmatpush1.bf16.msra.mxu0 %v1221
  %1433 = vmatprep.subr.bf16.mxu0 %v1215
  %1434 = vmatpush1.bf16.msra.mxu0 %v1214
  %1435 = vmatprep.subr.bf16.mxu0 %v1208
  %1436 = vmatpush1.bf16.msra.mxu0 %v1207
  %1437 = vmatprep.subr.bf16.mxu0 0
  %1438 = vmatpush2.bf16.msra.mxu0 0
  %1439 = vmatprep.subr.bf16.mxu0 0
  %1440 = vmatpush2.bf16.msra.mxu0 0
  %1441 = vmatprep.subr.bf16.mxu0 0
  %1442 = vmatpush2.bf16.msra.mxu0 0
  %1443 = vmatprep.subr.bf16.mxu0 0
  %1444 = vmatpush2.bf16.msra.mxu0 0
  %1445 = vmatprep.subr.bf16.mxu0 0
  %1446 = vmatpush2.bf16.msra.mxu0 0
  %1447 = vmatprep.subr.bf16.mxu0 0
  %1448 = vmatpush2.bf16.msra.mxu0 0
  %1449 = vmatprep.subr.bf16.mxu0 0
  %1450 = vmatpush2.bf16.msra.mxu0 0
  %1451 = vmatprep.subr.bf16.mxu0 0
  %1452 = vmatpush2.bf16.msra.mxu0 0
  %1453 = vmatprep.mubr.bf16.mxu0 0
  %1454 = vmatmul.mubr.bf16.gmra.mxu0 %v961
  %v1455 = vpop.f32.mrf.mxu0
  %v1456 = vadd.f32 0.0, %v1455
  %v1457 = vpop.f32.mrf.mxu0
  %v1458 = vadd.f32 0.0, %v1457
  %v1459 = vpop.f32.mrf.mxu0
  %v1460 = vadd.f32 0.0, %v1459
  %v1461 = vpop.f32.mrf.mxu0
  %v1462 = vadd.f32 0.0, %v1461
  %1463 = vmatprep.mubr.bf16.mxu0 0
  %1464 = vmatmul.mubr.bf16.gmra.mxu0 %v962
  %v1465 = vpop.f32.mrf.mxu0
  %v1466 = vadd.f32 0.0, %v1465
  %v1467 = vpop.f32.mrf.mxu0
  %v1468 = vadd.f32 0.0, %v1467
  %v1469 = vpop.f32.mrf.mxu0
  %v1470 = vadd.f32 0.0, %v1469
  %v1471 = vpop.f32.mrf.mxu0
  %v1472 = vadd.f32 0.0, %v1471
  %1473 = vdwg.mxu0
  %1474 = vmatprep.subr.bf16.mxu0 0
  %1475 = vmatpush1.bf16.msra.mxu0 %v1258
  %1476 = vmatprep.subr.bf16.mxu0 0
  %1477 = vmatpush1.bf16.msra.mxu0 %v1251
  %1478 = vmatprep.subr.bf16.mxu0 0
  %1479 = vmatpush1.bf16.msra.mxu0 %v1244
  %1480 = vmatprep.subr.bf16.mxu0 0
  %1481 = vmatpush1.bf16.msra.mxu0 %v1237
  %1482 = vmatprep.subr.bf16.mxu0 0
  %1483 = vmatpush1.bf16.msra.mxu0 %v1230
  %1484 = vmatprep.subr.bf16.mxu0 0
  %1485 = vmatpush1.bf16.msra.mxu0 %v1223
  %1486 = vmatprep.subr.bf16.mxu0 0
  %1487 = vmatpush1.bf16.msra.mxu0 %v1216
  %1488 = vmatprep.subr.bf16.mxu0 0
  %1489 = vmatpush1.bf16.msra.mxu0 %v1209
  %1490 = vmatprep.subr.bf16.mxu0 0
  %1491 = vmatpush2.bf16.msra.mxu0 0
  %1492 = vmatprep.subr.bf16.mxu0 0
  %1493 = vmatpush2.bf16.msra.mxu0 0
  %1494 = vmatprep.subr.bf16.mxu0 0
  %1495 = vmatpush2.bf16.msra.mxu0 0
  %1496 = vmatprep.subr.bf16.mxu0 0
  %1497 = vmatpush2.bf16.msra.mxu0 0
  %1498 = vmatprep.subr.bf16.mxu0 0
  %1499 = vmatpush2.bf16.msra.mxu0 0
  %1500 = vmatprep.subr.bf16.mxu0 0
  %1501 = vmatpush2.bf16.msra.mxu0 0
  %1502 = vmatprep.subr.bf16.mxu0 0
  %1503 = vmatpush2.bf16.msra.mxu0 0
  %1504 = vmatprep.subr.bf16.mxu0 0
  %1505 = vmatpush2.bf16.msra.mxu0 0
  %1506 = vmatprep.mubr.bf16.mxu0 0
  %1507 = vmatmul.mubr.bf16.gmra.mxu0 %v961
  %v1508 = vpop.f32.mrf.mxu0
  %v1509 = vadd.f32 0.0, %v1508
  %v1510 = vpop.f32.mrf.mxu0
  %v1511 = vpop.f32.mrf.mxu0
  %v1512 = vadd.f32 0.0, %v1511
  %v1513 = vpop.f32.mrf.mxu0
  %1514 = vmatprep.mubr.bf16.mxu0 0
  %1515 = vmatmul.mubr.bf16.gmra.mxu0 %v962
  %v1516 = vpop.f32.mrf.mxu0
  %v1517 = vadd.f32 0.0, %v1516
  %v1518 = vpop.f32.mrf.mxu0
  %v1519 = vpop.f32.mrf.mxu0
  %v1520 = vadd.f32 0.0, %v1519
  %v1521 = vpop.f32.mrf.mxu0
  %1522 = vdwg.mxu0
  %v1523 = vld [vmem:[%s3 + $0x10] sm:$0xff]
  %v1524 = vld [vmem:[%s3 + $0x18] sm:$0xff]
  %v1525 = vld [vmem:[%s3 + $0x20] sm:$0xff]
  %v1526 = vld [vmem:[%s3 + $0x28] sm:$0xff]
  %v1527 = vld [vmem:[%s3 + $0x30] sm:$0xff]
  %v1528 = vld [vmem:[%s3 + $0x38] sm:$0xff]
  %v1529 = vld [vmem:[%s3 + $0x40] sm:$0xff]
  %v1530 = vld [vmem:[%s3 + $0x60] sm:$0xff]
  %v1531 = vld [vmem:[%s3 + $0x68] sm:$0xff]
  %v1532 = vld [vmem:[%s3 + $0x70] sm:$0xff]
  %v1533 = vld [vmem:[%s3 + $0x78] sm:$0xff]
  %v1534 = vld [vmem:[%s3 + $0x80] sm:$0xff]
  %v1535 = vld [vmem:[%s3 + $0x88] sm:$0xff]
  %v1536 = vld [vmem:[%s3 + $0x90] sm:$0xff]
  %v1537 = vld [vmem:[%s3 + $0xb0] sm:$0xff]
  %v1538 = vld [vmem:[%s3 + $0xb8] sm:$0xff]
  %v1539 = vld [vmem:[%s3 + $0xc0] sm:$0xff]
  %v1540 = vld [vmem:[%s3 + $0xc8] sm:$0xff]
  %v1541 = vld [vmem:[%s3 + $0xd0] sm:$0xff]
  %v1542 = vld [vmem:[%s3 + $0xd8] sm:$0xff]
  %v1543 = vld [vmem:[%s3 + $0xe0] sm:$0xff]
  %v1544 = vld [vmem:[%s3 + $0x100] sm:$0xff]
  %v1545 = vld [vmem:[%s3 + $0x108] sm:$0xff]
  %v1546 = vld [vmem:[%s3 + $0x110] sm:$0xff]
  %v1547 = vld [vmem:[%s3 + $0x118] sm:$0xff]
  %v1548 = vld [vmem:[%s3 + $0x120] sm:$0xff]
  %v1549 = vld [vmem:[%s3 + $0x128] sm:$0xff]
  %v1550 = vld [vmem:[%s3 + $0x130] sm:$0xff]
  %v1551 = vmul.f32 %v1350, %v1523
  %v1552 = vmul.f32 %v1352, %v1524
  %v1553 = vmul.f32 %v1403, %v1525
  %v1554 = vmul.f32 %v1405, %v1526
  %v1555 = vmul.f32 %v1456, %v1527
  %v1556 = vmul.f32 %v1458, %v1528
  %v1557 = vmul.f32 %v1509, %v1529
  %v1558 = vmul.f32 %v1354, %v1530
  %v1559 = vmul.f32 %v1356, %v1531
  %v1560 = vmul.f32 %v1407, %v1532
  %v1561 = vmul.f32 %v1409, %v1533
  %v1562 = vmul.f32 %v1460, %v1534
  %v1563 = vmul.f32 %v1462, %v1535
  %v1564 = vmul.f32 %v1512, %v1536
  %v1565 = vmul.f32 %v1360, %v1537
  %v1566 = vmul.f32 %v1362, %v1538
  %v1567 = vmul.f32 %v1413, %v1539
  %v1568 = vmul.f32 %v1415, %v1540
  %v1569 = vmul.f32 %v1466, %v1541
  %v1570 = vmul.f32 %v1468, %v1542
  %v1571 = vmul.f32 %v1517, %v1543
  %v1572 = vmul.f32 %v1364, %v1544
  %v1573 = vmul.f32 %v1366, %v1545
  %v1574 = vmul.f32 %v1417, %v1546
  %v1575 = vmul.f32 %v1419, %v1547
  %v1576 = vmul.f32 %v1470, %v1548
  %v1577 = vmul.f32 %v1472, %v1549
  %v1578 = vmul.f32 %v1520, %v1550
  %v1579 = vld [vmem:[%s4 + $0x90] sm:$0xff]
  %v1580 = vld [vmem:[%s4 + $0x98] sm:$0xff]
  %v1581 = vld [vmem:[%s4 + $0xa0] sm:$0xff]
  %v1582 = vld [vmem:[%s4 + $0xa8] sm:$0xff]
  %v1583 = vld [vmem:[%s4 + $0xb0] sm:$0xff]
  %v1584 = vld [vmem:[%s4 + $0xb8] sm:$0xff]
  %v1585 = vld [vmem:[%s4 + $0xc0] sm:$0xff]
  %v1586 = vld [vmem:[%s4 + $0xc8] sm:$0xff]
  %v1587 = vld [vmem:[%s4 + $0xd0] sm:$0xff]
  %v1588 = vld [vmem:[%s4 + $0xd8] sm:$0xff]
  %v1589 = vld [vmem:[%s4 + $0xe0] sm:$0xff]
  %v1590 = vld [vmem:[%s4 + $0xe8] sm:$0xff]
  %v1591 = vld [vmem:[%s4 + $0xf0] sm:$0xff]
  %v1592 = vld [vmem:[%s4 + $0xf8] sm:$0xff]
  %v1593 = vld [vmem:[%s4 + $0x100] sm:$0xff]
  %vm1594 = vcmask 982016
  %v1596 = vsel %vm1594, %v1551, 0
  %v1599 = vsel %vm1594, %v1558, 0
  %v1602 = vsel %vm1594, %v1565, 0
  %v1605 = vsel %vm1594, %v1572, 0
  %1607 = vmatprep.subr.mxu0 0.0
  %1608 = vmatpush1.msra.mxu0 0.0
  %1609 = vmatprep.subr.mxu0 0.0
  %1610 = vmatpush1.msra.mxu0 %v1593
  %1611 = vmatprep.subr.mxu0 0.0
  %1612 = vmatpush1.msra.mxu0 %v1592
  %1613 = vmatprep.subr.mxu0 0.0
  %1614 = vmatpush1.msra.mxu0 %v1591
  %1615 = vmatprep.subr.mxu0 0.0
  %1616 = vmatpush1.msra.mxu0 %v1590
  %1617 = vmatprep.subr.mxu0 0.0
  %1618 = vmatpush1.msra.mxu0 %v1589
  %1619 = vmatprep.subr.mxu0 0.0
  %1620 = vmatpush1.msra.mxu0 %v1588
  %1621 = vmatprep.subr.mxu0 0.0
  %1622 = vmatpush1.msra.mxu0 %v1587
  %1623 = vmatprep.subr.mxu0 0.0
  %1624 = vmatpush1.msra.mxu0 %v1586
  %1625 = vmatprep.subr.mxu0 0.0
  %1626 = vmatpush1.msra.mxu0 %v1585
  %1627 = vmatprep.subr.mxu0 0.0
  %1628 = vmatpush1.msra.mxu0 %v1584
  %1629 = vmatprep.subr.mxu0 0.0
  %1630 = vmatpush1.msra.mxu0 %v1583
  %1631 = vmatprep.subr.mxu0 0.0
  %1632 = vmatpush1.msra.mxu0 %v1582
  %1633 = vmatprep.subr.mxu0 0.0
  %1634 = vmatpush1.msra.mxu0 %v1581
  %1635 = vmatprep.subr.mxu0 0.0
  %1636 = vmatpush1.msra.mxu0 %v1580
  %1637 = vmatprep.subr.mxu0 0.0
  %1638 = vmatpush1.msra.mxu0 %v1579
  %1639 = vmatprep.subr.mxu0 0.0
  %1640 = vmatpush2.msra.mxu0 0.0
  %1641 = vmatprep.subr.mxu0 0.0
  %1642 = vmatpush2.msra.mxu0 0.0
  %1643 = vmatprep.subr.mxu0 0.0
  %1644 = vmatpush2.msra.mxu0 0.0
  %1645 = vmatprep.subr.mxu0 0.0
  %1646 = vmatpush2.msra.mxu0 0.0
  %1647 = vmatprep.subr.mxu0 0.0
  %1648 = vmatpush2.msra.mxu0 0.0
  %1649 = vmatprep.subr.mxu0 0.0
  %1650 = vmatpush2.msra.mxu0 0.0
  %1651 = vmatprep.subr.mxu0 0.0
  %1652 = vmatpush2.msra.mxu0 0.0
  %1653 = vmatprep.subr.mxu0 0.0
  %1654 = vmatpush2.msra.mxu0 0.0
  %1655 = vmatprep.subr.mxu0 0.0
  %1656 = vmatpush2.msra.mxu0 0.0
  %1657 = vmatprep.subr.mxu0 0.0
  %1658 = vmatpush2.msra.mxu0 0.0
  %1659 = vmatprep.subr.mxu0 0.0
  %1660 = vmatpush2.msra.mxu0 0.0
  %1661 = vmatprep.subr.mxu0 0.0
  %1662 = vmatpush2.msra.mxu0 0.0
  %1663 = vmatprep.subr.mxu0 0.0
  %1664 = vmatpush2.msra.mxu0 0.0
  %1665 = vmatprep.subr.mxu0 0.0
  %1666 = vmatpush2.msra.mxu0 0.0
  %1667 = vmatprep.subr.mxu0 0.0
  %1668 = vmatpush2.msra.mxu0 0.0
  %1669 = vmatprep.subr.mxu0 0.0
  %1670 = vmatpush2.msra.mxu0 0.0
  %1671 = vmatprep.mubr.f32.mxu0 0.0
  %1672 = vmatmul.mubr.f32.gmra.mxu0 %v1596
  %v1673 = vpop.f32.mrf.mxu0
  %v1674 = vadd.f32 0.0, %v1673
  %v1675 = vpop.f32.mrf.mxu0
  %1676 = vmatprep.mubr.f32.mxu0 0.0
  %1677 = vmatmul.mubr.f32.gmra.mxu0 %v1599
  %v1678 = vpop.f32.mrf.mxu0
  %v1679 = vadd.f32 0.0, %v1678
  %v1680 = vpop.f32.mrf.mxu0
  %1681 = vmatprep.mubr.f32.mxu0 0.0
  %1682 = vmatmul.mubr.f32.gmra.mxu0 %v1602
  %v1683 = vpop.f32.mrf.mxu0
  %v1684 = vadd.f32 0.0, %v1683
  %v1685 = vpop.f32.mrf.mxu0
  %1686 = vmatprep.mubr.f32.mxu0 0.0
  %1687 = vmatmul.mubr.f32.gmra.mxu0 %v1605
  %v1688 = vpop.f32.mrf.mxu0
  %v1689 = vadd.f32 0.0, %v1688
  %v1690 = vpop.f32.mrf.mxu0
  %1691 = vdwg.mxu0
  %v1692 = vld [vmem:[%s4 + $0x109] sm:$0x1]
  %v1693 = vlaneseq
  %v1694 = vshrl.u32 %v1693, 7
  %v1695 = vsub.s32 0, %v1694
  %v1696 = vrot.slane %v1692, %v1695
  %1697 = vmatprep.subr.mxu0 0.0
  %1698 = vmatpush1.msra.mxu0 0.0
  %1699 = vmatprep.subr.mxu0 0.0
  %1700 = vmatpush1.msra.mxu0 0.0
  %1701 = vmatprep.subr.mxu0 0.0
  %1702 = vmatpush1.msra.mxu0 0.0
  %1703 = vmatprep.subr.mxu0 0.0
  %1704 = vmatpush1.msra.mxu0 0.0
  %1705 = vmatprep.subr.mxu0 0.0
  %1706 = vmatpush1.msra.mxu0 0.0
  %1707 = vmatprep.subr.mxu0 0.0
  %1708 = vmatpush1.msra.mxu0 0.0
  %1709 = vmatprep.subr.mxu0 0.0
  %1710 = vmatpush1.msra.mxu0 0.0
  %1711 = vmatprep.subr.mxu0 0.0
  %1712 = vmatpush1.msra.mxu0 0.0
  %1713 = vmatprep.subr.mxu0 0.0
  %1714 = vmatpush1.msra.mxu0 0.0
  %1715 = vmatprep.subr.mxu0 0.0
  %1716 = vmatpush1.msra.mxu0 0.0
  %1717 = vmatprep.subr.mxu0 0.0
  %1718 = vmatpush1.msra.mxu0 0.0
  %1719 = vmatprep.subr.mxu0 0.0
  %1720 = vmatpush1.msra.mxu0 0.0
  %1721 = vmatprep.subr.mxu0 0.0
  %1722 = vmatpush1.msra.mxu0 %v1689
  %1723 = vmatprep.subr.mxu0 0.0
  %1724 = vmatpush1.msra.mxu0 %v1684
  %1725 = vmatprep.subr.mxu0 0.0
  %1726 = vmatpush1.msra.mxu0 %v1679
  %1727 = vmatprep.subr.mxu0 0.0
  %1728 = vmatpush1.msra.mxu0 %v1674
  %1729 = vmatprep.subr.mxu0 0.0
  %1730 = vmatpush2.msra.mxu0 0.0
  %1731 = vmatprep.subr.mxu0 0.0
  %1732 = vmatpush2.msra.mxu0 0.0
  %1733 = vmatprep.subr.mxu0 0.0
  %1734 = vmatpush2.msra.mxu0 0.0
  %1735 = vmatprep.subr.mxu0 0.0
  %1736 = vmatpush2.msra.mxu0 0.0
  %1737 = vmatprep.subr.mxu0 0.0
  %1738 = vmatpush2.msra.mxu0 0.0
  %1739 = vmatprep.subr.mxu0 0.0
  %1740 = vmatpush2.msra.mxu0 0.0
  %1741 = vmatprep.subr.mxu0 0.0
  %1742 = vmatpush2.msra.mxu0 0.0
  %1743 = vmatprep.subr.mxu0 0.0
  %1744 = vmatpush2.msra.mxu0 0.0
  %1745 = vmatprep.subr.mxu0 0.0
  %1746 = vmatpush2.msra.mxu0 0.0
  %1747 = vmatprep.subr.mxu0 0.0
  %1748 = vmatpush2.msra.mxu0 0.0
  %1749 = vmatprep.subr.mxu0 0.0
  %1750 = vmatpush2.msra.mxu0 0.0
  %1751 = vmatprep.subr.mxu0 0.0
  %1752 = vmatpush2.msra.mxu0 0.0
  %1753 = vmatprep.subr.mxu0 0.0
  %1754 = vmatpush2.msra.mxu0 0.0
  %1755 = vmatprep.subr.mxu0 0.0
  %1756 = vmatpush2.msra.mxu0 0.0
  %1757 = vmatprep.subr.mxu0 0.0
  %1758 = vmatpush2.msra.mxu0 0.0
  %1759 = vmatprep.subr.mxu0 0.0
  %1760 = vmatpush2.msra.mxu0 0.0
  %1761 = vmatprep.mubr.f32.mxu0 0.0
  %1762 = vmatmul.mubr.f32.gmra.mxu0 %v549
  %v1763 = vpop.f32.mrf.mxu0
  %v1764 = vadd.f32 %v1696, %v1763
  %v1765 = vpop.f32.mrf.mxu0
  %1766 = vdwg.mxu0
  %1767 = vst.msk [vmem:[%s5 + $0x42] sm:$0x3] %vm621, %v1764
  %v1768 = vadd.f32 %v1552, %v1553
  %v1769 = vadd.f32 %v1559, %v1560
  %v1770 = vadd.f32 %v1566, %v1567
  %v1771 = vadd.f32 %v1573, %v1574
  %v1772 = vadd.f32 %v1768, %v1554
  %v1773 = vadd.f32 %v1769, %v1561
  %v1774 = vadd.f32 %v1770, %v1568
  %v1775 = vadd.f32 %v1771, %v1575
  %v1776 = vadd.f32 %v1772, %v1555
  %v1777 = vadd.f32 %v1773, %v1562
  %v1778 = vadd.f32 %v1774, %v1569
  %v1779 = vadd.f32 %v1775, %v1576
  %v1780 = vadd.f32 %v1776, %v1556
  %v1781 = vadd.f32 %v1777, %v1563
  %v1782 = vadd.f32 %v1778, %v1570
  %v1783 = vadd.f32 %v1779, %v1577
  %v1784 = vadd.f32 %v1780, %v1557
  %v1785 = vadd.f32 %v1781, %v1564
  %v1786 = vadd.f32 %v1782, %v1571
  %v1787 = vadd.f32 %v1783, %v1578
  %1792 = vrot.lane.b32.xlu0 %v1784, 64
  %v1793 = vpop.permute.xlu0 %1792
  %1794 = vrot.lane.b32.xlu0 %v1785, 64
  %v1795 = vpop.permute.xlu0 %1794
  %1796 = vrot.lane.b32.xlu0 %v1786, 64
  %v1797 = vpop.permute.xlu0 %1796
  %1798 = vrot.lane.b32.xlu0 %v1787, 64
  %v1799 = vpop.permute.xlu0 %1798
  %v1804 = vadd.f32 %v1784, %v1793
  %v1805 = vadd.f32 %v1785, %v1795
  %v1806 = vadd.f32 %v1786, %v1797
  %v1807 = vadd.f32 %v1787, %v1799
  %v1808 = vld [vmem:[%s4 + $0x10a] sm:$0x1]
  %v1809 = vlaneseq
  %v1810 = vshrl.u32 %v1809, 7
  %v1811 = vsub.s32 0, %v1810
  %v1812 = vrot.slane %v1808, %v1811
  %1813 = vmatprep.subr.mxu0 0.0
  %1814 = vmatpush1.msra.mxu0 0.0
  %1815 = vmatprep.subr.mxu0 0.0
  %1816 = vmatpush1.msra.mxu0 0.0
  %1817 = vmatprep.subr.mxu0 0.0
  %1818 = vmatpush1.msra.mxu0 0.0
  %1819 = vmatprep.subr.mxu0 0.0
  %1820 = vmatpush1.msra.mxu0 0.0
  %1821 = vmatprep.subr.mxu0 0.0
  %1822 = vmatpush1.msra.mxu0 0.0
  %1823 = vmatprep.subr.mxu0 0.0
  %1824 = vmatpush1.msra.mxu0 0.0
  %1825 = vmatprep.subr.mxu0 0.0
  %1826 = vmatpush1.msra.mxu0 0.0
  %1827 = vmatprep.subr.mxu0 0.0
  %1828 = vmatpush1.msra.mxu0 0.0
  %1829 = vmatprep.subr.mxu0 0.0
  %1830 = vmatpush1.msra.mxu0 0.0
  %1831 = vmatprep.subr.mxu0 0.0
  %1832 = vmatpush1.msra.mxu0 0.0
  %1833 = vmatprep.subr.mxu0 0.0
  %1834 = vmatpush1.msra.mxu0 0.0
  %1835 = vmatprep.subr.mxu0 0.0
  %1836 = vmatpush1.msra.mxu0 0.0
  %1837 = vmatprep.subr.mxu0 0.0
  %1838 = vmatpush1.msra.mxu0 %v1807
  %1839 = vmatprep.subr.mxu0 0.0
  %1840 = vmatpush1.msra.mxu0 %v1806
  %1841 = vmatprep.subr.mxu0 0.0
  %1842 = vmatpush1.msra.mxu0 %v1805
  %1843 = vmatprep.subr.mxu0 0.0
  %1844 = vmatpush1.msra.mxu0 %v1804
  %1845 = vmatprep.subr.mxu0 0.0
  %1846 = vmatpush2.msra.mxu0 0.0
  %1847 = vmatprep.subr.mxu0 0.0
  %1848 = vmatpush2.msra.mxu0 0.0
  %1849 = vmatprep.subr.mxu0 0.0
  %1850 = vmatpush2.msra.mxu0 0.0
  %1851 = vmatprep.subr.mxu0 0.0
  %1852 = vmatpush2.msra.mxu0 0.0
  %1853 = vmatprep.subr.mxu0 0.0
  %1854 = vmatpush2.msra.mxu0 0.0
  %1855 = vmatprep.subr.mxu0 0.0
  %1856 = vmatpush2.msra.mxu0 0.0
  %1857 = vmatprep.subr.mxu0 0.0
  %1858 = vmatpush2.msra.mxu0 0.0
  %1859 = vmatprep.subr.mxu0 0.0
  %1860 = vmatpush2.msra.mxu0 0.0
  %1861 = vmatprep.subr.mxu0 0.0
  %1862 = vmatpush2.msra.mxu0 0.0
  %1863 = vmatprep.subr.mxu0 0.0
  %1864 = vmatpush2.msra.mxu0 0.0
  %1865 = vmatprep.subr.mxu0 0.0
  %1866 = vmatpush2.msra.mxu0 0.0
  %1867 = vmatprep.subr.mxu0 0.0
  %1868 = vmatpush2.msra.mxu0 0.0
  %1869 = vmatprep.subr.mxu0 0.0
  %1870 = vmatpush2.msra.mxu0 0.0
  %1871 = vmatprep.subr.mxu0 0.0
  %1872 = vmatpush2.msra.mxu0 0.0
  %1873 = vmatprep.subr.mxu0 0.0
  %1874 = vmatpush2.msra.mxu0 0.0
  %1875 = vmatprep.subr.mxu0 0.0
  %1876 = vmatpush2.msra.mxu0 0.0
  %1877 = vmatprep.mubr.f32.mxu0 0.0
  %1878 = vmatmul.mubr.f32.gmra.mxu0 %v549
  %v1879 = vpop.f32.mrf.mxu0
  %v1880 = vadd.f32 %v1812, %v1879
  %v1881 = vpop.f32.mrf.mxu0
  %1882 = vdwg.mxu0
  %vm1883 = vcmask 517120
  %1884 = vst.msk [vmem:[%s5 + $0x46] sm:$0x3] %vm1883, %v1880
  %vm1885 = vcmp.ge.f32.partialorder %v1880, 0.25
  %v1886 = vsel %vm1885, 1, 0
  %v1887 = vcvt.s32.f32 %v1886
  %v1888 = vpack.c.bf16 %v1887, %v1887
  %v1889 = vld [vmem:[%s2 + $0x24] sm:$0xf]
  %v1890 = vld [vmem:[%s2 + $0x4c] sm:$0xf]
  %v1891 = vld [vmem:[%s2 + $0x74] sm:$0xf]
  %v1892 = vld [vmem:[%s2 + $0x9c] sm:$0xf]
  %v1893 = vld [vmem:[%s2 + $0xc4] sm:$0xf]
  %v1894 = vld [vmem:[%s2 + $0xec] sm:$0xf]
  %v1895 = vld [vmem:[%s2 + $0x114] sm:$0xf]
  %v1896 = vld [vmem:[%s2 + $0x13c] sm:$0xf]
  %v1897 = vld [vmem:[%s4 + $0x10b] sm:$0x1]
  %v1898 = vlaneseq
  %v1899 = vshrl.u32 %v1898, 7
  %v1900 = vsub.s32 0, %v1899
  %v1901 = vrot.slane %v1897, %v1900
  %v1910 = vunpack.c.l.b16 %v1889
  %v1911 = vunpack.c.l.b16 %v1890
  %v1912 = vunpack.c.l.b16 %v1891
  %v1913 = vunpack.c.l.b16 %v1892
  %v1914 = vunpack.c.l.b16 %v1893
  %v1915 = vunpack.c.l.b16 %v1894
  %v1916 = vunpack.c.l.b16 %v1895
  %v1917 = vunpack.c.l.b16 %v1896
  %v1918 = vpack.c.b16 %v1911, %v1910
  %v1919 = vpack.c.b16 %v1913, %v1912
  %v1920 = vpack.c.b16 %v1915, %v1914
  %v1921 = vpack.c.b16 %v1917, %v1916
  %v1927 = vsel %vm79, %v1888, 0
  %1929 = vmatprep.subr.bf16.mxu0 0
  %1930 = vmatpush1.bf16.msra.mxu0 0
  %1931 = vmatprep.subr.bf16.mxu0 0
  %1932 = vmatpush1.bf16.msra.mxu0 0
  %1933 = vmatprep.subr.bf16.mxu0 0
  %1934 = vmatpush1.bf16.msra.mxu0 0
  %1935 = vmatprep.subr.bf16.mxu0 0
  %1936 = vmatpush1.bf16.msra.mxu0 0
  %1937 = vmatprep.subr.bf16.mxu0 0
  %1938 = vmatpush1.bf16.msra.mxu0 %v1921
  %1939 = vmatprep.subr.bf16.mxu0 0
  %1940 = vmatpush1.bf16.msra.mxu0 %v1920
  %1941 = vmatprep.subr.bf16.mxu0 0
  %1942 = vmatpush1.bf16.msra.mxu0 %v1919
  %1943 = vmatprep.subr.bf16.mxu0 0
  %1944 = vmatpush1.bf16.msra.mxu0 %v1918
  %1945 = vmatprep.subr.bf16.mxu0 0
  %1946 = vmatpush2.bf16.msra.mxu0 0
  %1947 = vmatprep.subr.bf16.mxu0 0
  %1948 = vmatpush2.bf16.msra.mxu0 0
  %1949 = vmatprep.subr.bf16.mxu0 0
  %1950 = vmatpush2.bf16.msra.mxu0 0
  %1951 = vmatprep.subr.bf16.mxu0 0
  %1952 = vmatpush2.bf16.msra.mxu0 0
  %1953 = vmatprep.subr.bf16.mxu0 0
  %1954 = vmatpush2.bf16.msra.mxu0 0
  %1955 = vmatprep.subr.bf16.mxu0 0
  %1956 = vmatpush2.bf16.msra.mxu0 0
  %1957 = vmatprep.subr.bf16.mxu0 0
  %1958 = vmatpush2.bf16.msra.mxu0 0
  %1959 = vmatprep.subr.bf16.mxu0 0
  %1960 = vmatpush2.bf16.msra.mxu0 0
  %1961 = vmatprep.mubr.bf16.mxu0 0
  %1962 = vmatmul.mubr.bf16.gmra.mxu0 %v1927
  %v1963 = vpop.f32.mrf.mxu0
  %v1964 = vadd.f32 %v1901, %v1963
  %v1965 = vpop.f32.mrf.mxu0
  %v1966 = vpop.f32.mrf.mxu0
  %v1967 = vpop.f32.mrf.mxu0
  %1968 = vdwg.mxu0
  %1969 = vst.msk [vmem:[%s5 + $0x44] sm:$0x3] %vm621, %v1964
  // Predicated region
  $region22: #{tfr_rtrl_scnn_forward.1} parent=0 // pred_check
    _
  $region23: #{tfr_rtrl_scnn_forward.1} parent=0 // pred_check_branch
    %1971 = sbr.rel (0) target = $region25
  $region24: #{tfr_rtrl_scnn_forward.1} parent=0 // pred_region
    _
  $region25: #{tfr_rtrl_scnn_forward.1} parent=0 // pred_fallthru
    _
  // Predicated region
  $region26: #{tfr_rtrl_scnn_forward.1} parent=0 // pred_check
    _
  $region27: #{tfr_rtrl_scnn_forward.1} parent=0 // pred_check_branch
    %1973 = sbr.rel (0) target = $region29
  $region28: #{tfr_rtrl_scnn_forward.1} parent=0 // pred_region
    _
  $region29: #{tfr_rtrl_scnn_forward.1} parent=0 // pred_fallthru
    _

</llo_original>
